<compile_context>
chip_gen: v7x
topology: tpu7x:2x2x1
jax: 0.10.0
libtpu: 0.0.40
codegen_flags: <defaults>
</compile_context>

<pallas_src>
import functools

import jax
import jax.numpy as jnp
import numpy as np
from jax import lax
from jax.experimental import pallas as pl
from jax.experimental.pallas import tpu as pltpu

N = 128        # batch size, hard-coded by the PyTorch module
EPS = 1e-12    # clamp used in euclidean_dist


def _triplet_kernel(f1_ref, f2t_ref, tcol_ref, trow_ref, loss_ref, count_ref,
                    *, margin, num_neg_half):
    raw1 = f1_ref[...]                          # (N, D) caller dtype (global_feat1)
    raw2t = f2t_ref[...]                        # (D, N) caller dtype (global_feat2^T)
    f1 = raw1.astype(jnp.float32)
    tcol = tcol_ref[...]                        # (N, 1) int32 labels
    trow = trow_ref[...]                        # (1, N) int32 labels
    n, d = f1.shape

    # ---- euclidean_dist(global_feat1, global_feat2), sqrt/clamp deferred.
    # Mining only needs the per-row ordering, so we mine on
    #   score[i,j] = ||y_j||^2 - 2<x_i, y_j>
    # (the per-row constant ||x_i||^2 and the EPS clamp + sqrt commute with the
    # row max/min and are applied on the reduced (N,1) values only).
    gram = jnp.dot(raw1, raw2t, preferred_element_type=jnp.float32)      # (N,N)
    f2t = raw2t.astype(jnp.float32)
    yy_row = jnp.sum(f2t * f2t, axis=0, keepdims=True)                   # (1,N)
    score = yy_row - 2.0 * gram                                          # (N,N)
    xx = jnp.sum(f1 * f1, axis=1, keepdims=True)                         # (N,1)

    # ---- positive / negative masks
    is_pos = (tcol == trow)                                              # (N,N)
    is_neg = jnp.logical_not(is_pos)

    # ---- hard positive mining: dist_ap[i] = max_{j pos} dist[i,j]
    ap_sq = xx + jnp.max(jnp.where(is_pos, score, -jnp.inf),
                         axis=1, keepdims=True)                          # (N,1)
    dist_ap = jnp.sqrt(jnp.maximum(ap_sq, EPS))                          # (N,1)

    # ---- rank of each negative column among that anchor's (column-sorted)
    # negatives: rank[i,j] = #{k < j : is_neg[i,k]}.  0/1 bf16 operands with
    # f32 accumulation are bit-exact here (counts <= 127) and native on all MXUs.
    rows_i = lax.broadcasted_iota(jnp.int32, (n, n), 0)
    cols_i = lax.broadcasted_iota(jnp.int32, (n, n), 1)
    strict_upper = (rows_i < cols_i).astype(jnp.bfloat16)    # L[k,j]=1 iff k<j
    rank = jnp.dot(is_neg.astype(jnp.bfloat16), strict_upper,
                   preferred_element_type=jnp.float32)                   # (N,N)

    half_f = jnp.float32(num_neg_half)
    dm_neg = jnp.where(is_neg, score, jnp.inf)   # shared negative-masked scores

    def leftmost_argmin_onehot(half_mask):
        # Boolean one-hot of the left-most row-minimum among the active columns
        # (matches torch.topk(largest=False) first index).  Pure VPU/XLU.
        dm = jnp.where(half_mask, dm_neg, jnp.inf)
        mn = jnp.min(dm, axis=1, keepdims=True)
        idx = jnp.min(jnp.where(dm <= mn, cols_i, n), axis=1, keepdims=True)
        # NOTE: if an anchor has no active columns (impossible under the module's
        # hard-coded 56/56 split) this silently selects column 0.
        return cols_i == idx

    oh1 = leftmost_argmin_onehot(rank < half_f)      # nearest of first 56 negatives
    oh2 = leftmost_argmin_onehot(rank >= half_f)     # nearest of last  56 negatives

    # ---- mean of the two selected negatives, fused into ONE gather matmul in the
    # caller's dtype (one-hots are disjoint; 0/1 cast is exact; f32 accumulation).
    oh_sum = jnp.logical_or(oh1, oh2).astype(raw1.dtype)                 # (N,N)

    # chunk(4)/cat re-arrangement == swap row-blocks [q:2q] and [2q:3q]; apply it
    # to the smaller operand with static, 8-sublane-aligned 32-row slices.
    q = n // 4                                                           # 32
    if d <= n:
        mid2 = jnp.dot(oh_sum, raw1, preferred_element_type=jnp.float32)  # (N,D)
        mid2 = jnp.concatenate(
            [mid2[0:q], mid2[2 * q:3 * q], mid2[q:2 * q], mid2[3 * q:]], axis=0)
    else:
        oh_p = jnp.concatenate(
            [oh_sum[0:q], oh_sum[2 * q:3 * q], oh_sum[q:2 * q], oh_sum[3 * q:]],
            axis=0)
        mid2 = jnp.dot(oh_p, raw1, preferred_element_type=jnp.float32)    # (N,D)

    # diag(euclidean_dist(feat_rgb, feat_rgb_mid)) ++ diag(... feat_ir ...)
    # mid2 holds f1[j1]+f1[j2]; the 0.5 "mean" scale is folded in here.
    diff = f1 - 0.5 * mid2
    dist_an = jnp.sqrt(jnp.maximum(jnp.sum(diff * diff, axis=1, keepdims=True),
                                   EPS))                                  # (N,1)

    tri = dist_ap - dist_an + jnp.float32(margin)                         # (N,1)
    pos_m = tri > 0.0
    loss = jnp.sum(jnp.where(pos_m, tri, 0.0)) / 128.0
    cnt = jnp.sum(pos_m.astype(jnp.float32))

    loss_ref[0, 0] = loss
    count_ref[0, 0] = cnt.astype(jnp.int32)


def triplet_loss_balanced_2branch1(global_feat1, global_feat2, target, margin,
                                    num_neg_half=56):
    """Pallas implementation of TripletLoss_Balanced_2branch1.forward.

    `num_neg_half` defaults to 56, matching the module's hard-coded 112/56 split
    (avoids concretizing a traced `target` under jit).
    """
    n, d = global_feat1.shape
    assert n == N, "the PyTorch module hard-codes a batch size of 128"
    tgt = jnp.asarray(target, dtype=jnp.int32)
    tcol = tgt.reshape(n, 1)
    trow = tgt.reshape(1, n)
    # Pre-transpose feat2 outside the kernel: gram becomes a plain NN matmul and
    # ||y||^2 a sublane reduction (no in-kernel XLU transpose, no M=1 matmul).
    f2t = jnp.transpose(jnp.asarray(global_feat2))                        # (D, N)

    kernel = functools.partial(_triplet_kernel,
                               margin=float(margin),
                               num_neg_half=int(num_neg_half))

    itemsize = jnp.dtype(global_feat1.dtype).itemsize
    cost = pl.CostEstimate(
        flops=2 * n * d * n        # gram
              + 2 * n * n * n      # rank matmul (bf16)
              + 2 * n * n * d,     # fused gather matmul
        transcendentals=2 * n,     # sqrt on the two (N,1) vectors only
        bytes_accessed=2 * n * d * itemsize + 2 * n * 4 + 8)

    loss, count = pl.pallas_call(
        kernel,
        out_shape=(jax.ShapeDtypeStruct((1, 1), jnp.float32),
                   jax.ShapeDtypeStruct((1, 1), jnp.int32)),
        in_specs=[pl.BlockSpec(memory_space=pltpu.MemorySpace.VMEM)] * 4,
        out_specs=(pl.BlockSpec(memory_space=pltpu.MemorySpace.SMEM),
                   pl.BlockSpec(memory_space=pltpu.MemorySpace.SMEM)),
        cost_estimate=cost,
    )(global_feat1, f2t, tcol, trow)
    return loss[0, 0], count[0, 0]


def _reference(f1, f2, target, margin):
    """Pure numpy mirror of the PyTorch forward (for validation)."""
    f1 = np.asarray(f1, dtype=np.float64)
    f2 = np.asarray(f2, dtype=np.float64)
    t = np.asarray(target)
    n = f1.shape[0]
    xx = np.sum(f1 * f1, axis=1, keepdims=True)
    yy = np.sum(f2 * f2, axis=1, keepdims=True).T
    dist = np.sqrt(np.maximum(xx + yy - 2.0 * (f1 @ f2.T), EPS))
    is_pos = t[:, None] == t[None, :]
    is_neg = ~is_pos
    dist_ap = np.max(np.where(is_pos, dist, -np.inf), axis=1)
    num_neg = int(is_neg[0].sum())
    half = num_neg // 2
    feat_mean = np.zeros_like(f1)
    for i in range(n):
        neg_idx = np.nonzero(is_neg[i])[0]        # sorted column indices
        dn = dist[i, neg_idx]
        j1 = int(np.argmin(dn[:half]))
        j2 = half + int(np.argmin(dn[half:]))
        feat_mean[i] = 0.5 * (f1[neg_idx[j1]] + f1[neg_idx[j2]])
    q = n // 4
    src = np.arange(n)
    src[q:2 * q] += q
    src[2 * q:3 * q] -= q
    mid = feat_mean[src]
    dist_an = np.sqrt(np.maximum(np.sum((f1 - mid) ** 2, axis=1), EPS))
    tri = dist_ap - dist_an + margin
    pos = tri > 0
    return tri[pos].sum() / 128.0, int(pos.sum())


if __name__ == "__main__":
    key = jax.random.PRNGKey(0)
    k1, k2 = jax.random.split(key)
    D = 64
    margin = 0.3
    # 8 identities x 16 samples (8 "RGB" rows then 8 "IR" rows per identity),
    # which yields the 112 negatives / 56-56 split the module hard-codes.
    target = jnp.concatenate([jnp.repeat(jnp.arange(8), 8),
                              jnp.repeat(jnp.arange(8), 8)]).astype(jnp.int32)
    global_feat1 = jax.random.normal(k1, (N, D), dtype=jnp.float32)
    global_feat2 = jax.random.normal(k2, (N, D), dtype=jnp.float32)

    loss, count = triplet_loss_balanced_2branch1(
        global_feat1, global_feat2, target, margin)
    loss = jax.block_until_ready(loss)
    count = jax.block_until_ready(count)

    ref_loss, ref_count = _reference(global_feat1, global_feat2, target, margin)

    assert np.isfinite(float(loss))
    assert abs(float(loss) - float(ref_loss)) <= 5e-3 * (1.0 + abs(float(ref_loss)))
    assert abs(int(count) - int(ref_count)) <= 1
    print("KERNEL_OK")
</pallas_src>

<mosaic_0001>
module attributes {stable_mosaic.version = 11 : i64} {
  func.func @_triplet_kernel(%arg0: memref<128x64xf32, #tpu.memory_space<vmem>>, %arg1: memref<64x128xf32, #tpu.memory_space<vmem>>, %arg2: memref<128x1xi32, #tpu.memory_space<vmem>>, %arg3: memref<1x128xi32, #tpu.memory_space<vmem>>, %arg4: memref<1x1xf32, #tpu.memory_space<smem>>, %arg5: memref<1x1xi32, #tpu.memory_space<smem>>) attributes {dimension_semantics = [], scalar_prefetch = 0 : i64, scratch_operands = 0 : i64, tpu.core_type = #tpu.core_type<tc>} {
    %c0 = arith.constant 0 : index
    %c0_0 = arith.constant 0 : index
    %0 = vector.load %arg0[%c0, %c0_0] : memref<128x64xf32, #tpu.memory_space<vmem>>, vector<128x64xf32>
    %c0_1 = arith.constant 0 : index
    %c0_2 = arith.constant 0 : index
    %1 = vector.load %arg1[%c0_1, %c0_2] : memref<64x128xf32, #tpu.memory_space<vmem>>, vector<64x128xf32>
    %c0_3 = arith.constant 0 : index
    %c0_4 = arith.constant 0 : index
    %2 = vector.load %arg2[%c0_3, %c0_4] : memref<128x1xi32, #tpu.memory_space<vmem>>, vector<128x1xi32>
    %c0_5 = arith.constant 0 : index
    %c0_6 = arith.constant 0 : index
    %3 = vector.load %arg3[%c0_5, %c0_6] : memref<1x128xi32, #tpu.memory_space<vmem>>, vector<1x128xi32>
    %cst = arith.constant dense<0.000000e+00> : vector<128x128xf32>
    %4 = tpu.matmul %0, %1, %cst {dimension_numbers = #tpu.dot_dimension_numbers<[1], [0], [0], [1], [0, 0, 1, 1], [], []>} : vector<128x64xf32>, vector<64x128xf32>, vector<128x128xf32> -> vector<128x128xf32>
    %5 = arith.mulf %1, %1 : vector<64x128xf32>
    %cst_7 = arith.constant dense<0.000000e+00> : vector<128xf32>
    %6 = vector.multi_reduction <add>, %5, %cst_7 [0] : vector<64x128xf32> to vector<128xf32>
    %7 = vector.shape_cast %6 : vector<128xf32> to vector<1x128xf32>
    %cst_8 = arith.constant 2.000000e+00 : f32
    %8 = vector.broadcast %cst_8 : f32 to vector<128x128xf32>
    %9 = arith.mulf %8, %4 : vector<128x128xf32>
    %10 = vector.broadcast %7 : vector<1x128xf32> to vector<128x128xf32>
    %11 = arith.subf %10, %9 : vector<128x128xf32>
    %12 = arith.mulf %0, %0 : vector<128x64xf32>
    %cst_9 = arith.constant dense<0.000000e+00> : vector<128xf32>
    %13 = vector.multi_reduction <add>, %12, %cst_9 [1] : vector<128x64xf32> to vector<128xf32>
    %14 = vector.shape_cast %13 : vector<128xf32> to vector<128x1xf32>
    %15 = vector.broadcast %2 : vector<128x1xi32> to vector<128x128xi32>
    %16 = vector.broadcast %3 : vector<1x128xi32> to vector<128x128xi32>
    %17 = arith.cmpi eq, %15, %16 : vector<128x128xi32>
    %cst_10 = arith.constant dense<true> : vector<128x128xi1>
    %18 = arith.xori %17, %cst_10 : vector<128x128xi1>
    %cst_11 = arith.constant 0xFF800000 : f32
    %19 = vector.broadcast %cst_11 : f32 to vector<128x128xf32>
    %20 = arith.select %17, %11, %19 : vector<128x128xi1>, vector<128x128xf32>
    %cst_12 = arith.constant dense<0xFF800000> : vector<128xf32>
    %21 = vector.multi_reduction <maximumf>, %20, %cst_12 [1] : vector<128x128xf32> to vector<128xf32>
    %22 = vector.shape_cast %21 : vector<128xf32> to vector<128x1xf32>
    %23 = arith.addf %14, %22 : vector<128x1xf32>
    %cst_13 = arith.constant 9.99999996E-13 : f32
    %24 = vector.broadcast %cst_13 : f32 to vector<128x1xf32>
    %25 = arith.maximumf %23, %24 : vector<128x1xf32>
    %26 = math.sqrt %25 : vector<128x1xf32>
    %27 = tpu.iota {dimensions = array<i32: 0>} : vector<128x128xi32>
    %28 = tpu.iota {dimensions = array<i32: 1>} : vector<128x128xi32>
    %29 = arith.cmpi slt, %27, %28 : vector<128x128xi32>
    %30 = arith.extui %29 : vector<128x128xi1> to vector<128x128xi32>
    %31 = arith.sitofp %30 : vector<128x128xi32> to vector<128x128xf32>
    %32 = arith.truncf %31 : vector<128x128xf32> to vector<128x128xbf16>
    %33 = arith.extui %18 : vector<128x128xi1> to vector<128x128xi32>
    %34 = arith.sitofp %33 : vector<128x128xi32> to vector<128x128xf32>
    %35 = arith.truncf %34 : vector<128x128xf32> to vector<128x128xbf16>
    %cst_14 = arith.constant dense<0.000000e+00> : vector<128x128xf32>
    %36 = tpu.matmul %35, %32, %cst_14 {dimension_numbers = #tpu.dot_dimension_numbers<[1], [0], [0], [1], [0, 0, 1, 1], [], []>} : vector<128x128xbf16>, vector<128x128xbf16>, vector<128x128xf32> -> vector<128x128xf32>
    %cst_15 = arith.constant 0x7F800000 : f32
    %37 = vector.broadcast %cst_15 : f32 to vector<128x128xf32>
    %38 = arith.select %18, %11, %37 : vector<128x128xi1>, vector<128x128xf32>
    %cst_16 = arith.constant 5.600000e+01 : f32
    %39 = vector.broadcast %cst_16 : f32 to vector<128x128xf32>
    %40 = arith.cmpf olt, %36, %39 : vector<128x128xf32>
    %cst_17 = arith.constant 0x7F800000 : f32
    %41 = vector.broadcast %cst_17 : f32 to vector<128x128xf32>
    %42 = arith.select %40, %38, %41 : vector<128x128xi1>, vector<128x128xf32>
    %cst_18 = arith.constant dense<0x7F800000> : vector<128xf32>
    %43 = vector.multi_reduction <minimumf>, %42, %cst_18 [1] : vector<128x128xf32> to vector<128xf32>
    %44 = vector.shape_cast %43 : vector<128xf32> to vector<128x1xf32>
    %45 = vector.broadcast %44 : vector<128x1xf32> to vector<128x128xf32>
    %46 = arith.cmpf ole, %42, %45 : vector<128x128xf32>
    %c128_i32 = arith.constant 128 : i32
    %47 = vector.broadcast %c128_i32 : i32 to vector<128x128xi32>
    %48 = arith.select %46, %28, %47 : vector<128x128xi1>, vector<128x128xi32>
    %cst_19 = arith.constant dense<2147483647> : vector<128xi32>
    %49 = vector.multi_reduction <minsi>, %48, %cst_19 [1] : vector<128x128xi32> to vector<128xi32>
    %50 = vector.shape_cast %49 : vector<128xi32> to vector<128x1xi32>
    %51 = vector.broadcast %50 : vector<128x1xi32> to vector<128x128xi32>
    %52 = arith.cmpi eq, %28, %51 : vector<128x128xi32>
    %cst_20 = arith.constant 5.600000e+01 : f32
    %53 = vector.broadcast %cst_20 : f32 to vector<128x128xf32>
    %54 = arith.cmpf oge, %36, %53 : vector<128x128xf32>
    %cst_21 = arith.constant 0x7F800000 : f32
    %55 = vector.broadcast %cst_21 : f32 to vector<128x128xf32>
    %56 = arith.select %54, %38, %55 : vector<128x128xi1>, vector<128x128xf32>
    %cst_22 = arith.constant dense<0x7F800000> : vector<128xf32>
    %57 = vector.multi_reduction <minimumf>, %56, %cst_22 [1] : vector<128x128xf32> to vector<128xf32>
    %58 = vector.shape_cast %57 : vector<128xf32> to vector<128x1xf32>
    %59 = vector.broadcast %58 : vector<128x1xf32> to vector<128x128xf32>
    %60 = arith.cmpf ole, %56, %59 : vector<128x128xf32>
    %c128_i32_23 = arith.constant 128 : i32
    %61 = vector.broadcast %c128_i32_23 : i32 to vector<128x128xi32>
    %62 = arith.select %60, %28, %61 : vector<128x128xi1>, vector<128x128xi32>
    %cst_24 = arith.constant dense<2147483647> : vector<128xi32>
    %63 = vector.multi_reduction <minsi>, %62, %cst_24 [1] : vector<128x128xi32> to vector<128xi32>
    %64 = vector.shape_cast %63 : vector<128xi32> to vector<128x1xi32>
    %65 = vector.broadcast %64 : vector<128x1xi32> to vector<128x128xi32>
    %66 = arith.cmpi eq, %28, %65 : vector<128x128xi32>
    %67 = arith.ori %52, %66 : vector<128x128xi1>
    %68 = arith.extui %67 : vector<128x128xi1> to vector<128x128xi32>
    %69 = arith.sitofp %68 : vector<128x128xi32> to vector<128x128xf32>
    %cst_25 = arith.constant dense<0.000000e+00> : vector<128x64xf32>
    %70 = tpu.matmul %69, %0, %cst_25 {dimension_numbers = #tpu.dot_dimension_numbers<[1], [0], [0], [1], [0, 0, 1, 1], [], []>} : vector<128x128xf32>, vector<128x64xf32>, vector<128x64xf32> -> vector<128x64xf32>
    %71 = vector.extract_strided_slice %70 {offsets = [0, 0], sizes = [32, 64], strides = [1, 1]} : vector<128x64xf32> to vector<32x64xf32>
    %72 = vector.extract_strided_slice %70 {offsets = [64, 0], sizes = [32, 64], strides = [1, 1]} : vector<128x64xf32> to vector<32x64xf32>
    %73 = vector.extract_strided_slice %70 {offsets = [32, 0], sizes = [32, 64], strides = [1, 1]} : vector<128x64xf32> to vector<32x64xf32>
    %74 = vector.extract_strided_slice %70 {offsets = [96, 0], sizes = [32, 64], strides = [1, 1]} : vector<128x64xf32> to vector<32x64xf32>
    %75 = tpu.concatenate %71, %72, %73, %74 in 0 : vector<32x64xf32>, vector<32x64xf32>, vector<32x64xf32>, vector<32x64xf32> -> vector<128x64xf32>
    %cst_26 = arith.constant 5.000000e-01 : f32
    %76 = vector.broadcast %cst_26 : f32 to vector<128x64xf32>
    %77 = arith.mulf %76, %75 : vector<128x64xf32>
    %78 = arith.subf %0, %77 : vector<128x64xf32>
    %79 = arith.mulf %78, %78 : vector<128x64xf32>
    %cst_27 = arith.constant dense<0.000000e+00> : vector<128xf32>
    %80 = vector.multi_reduction <add>, %79, %cst_27 [1] : vector<128x64xf32> to vector<128xf32>
    %81 = vector.shape_cast %80 : vector<128xf32> to vector<128x1xf32>
    %cst_28 = arith.constant 9.99999996E-13 : f32
    %82 = vector.broadcast %cst_28 : f32 to vector<128x1xf32>
    %83 = arith.maximumf %81, %82 : vector<128x1xf32>
    %84 = math.sqrt %83 : vector<128x1xf32>
    %85 = arith.subf %26, %84 : vector<128x1xf32>
    %cst_29 = arith.constant 3.000000e-01 : f32
    %86 = vector.broadcast %cst_29 : f32 to vector<128x1xf32>
    %87 = arith.addf %85, %86 : vector<128x1xf32>
    %cst_30 = arith.constant 0.000000e+00 : f32
    %88 = vector.broadcast %cst_30 : f32 to vector<128x1xf32>
    %89 = arith.cmpf ogt, %87, %88 : vector<128x1xf32>
    %cst_31 = arith.constant 0.000000e+00 : f32
    %90 = vector.broadcast %cst_31 : f32 to vector<128x1xf32>
    %91 = arith.select %89, %87, %90 : vector<128x1xi1>, vector<128x1xf32>
    %92 = vector.shape_cast %91 : vector<128x1xf32> to vector<1x128x1xf32>
    %cst_32 = arith.constant dense<0.000000e+00> : vector<1xf32>
    %93 = vector.multi_reduction <add>, %92, %cst_32 [1, 2] : vector<1x128x1xf32> to vector<1xf32>
    %94 = vector.shape_cast %93 : vector<1xf32> to vector<1x1x1xf32>
    %95 = vector.extract %94[0, 0, 0] : f32 from vector<1x1x1xf32>
    %cst_33 = arith.constant 1.280000e+02 : f32
    %96 = arith.divf %95, %cst_33 : f32
    %97 = arith.extui %89 : vector<128x1xi1> to vector<128x1xi32>
    %98 = arith.sitofp %97 : vector<128x1xi32> to vector<128x1xf32>
    %99 = vector.shape_cast %98 : vector<128x1xf32> to vector<1x128x1xf32>
    %cst_34 = arith.constant dense<0.000000e+00> : vector<1xf32>
    %100 = vector.multi_reduction <add>, %99, %cst_34 [1, 2] : vector<1x128x1xf32> to vector<1xf32>
    %101 = vector.shape_cast %100 : vector<1xf32> to vector<1x1x1xf32>
    %102 = vector.extract %101[0, 0, 0] : f32 from vector<1x1x1xf32>
    %c0_35 = arith.constant 0 : index
    %c0_36 = arith.constant 0 : index
    %103 = memref.load %arg4[%c0_35, %c0_36] : memref<1x1xf32, #tpu.memory_space<smem>>
    memref.store %96, %arg4[%c0_35, %c0_36] : memref<1x1xf32, #tpu.memory_space<smem>>
    %104 = arith.fptosi %102 : f32 to i32
    %c0_37 = arith.constant 0 : index
    %c0_38 = arith.constant 0 : index
    %105 = memref.load %arg5[%c0_37, %c0_38] : memref<1x1xi32, #tpu.memory_space<smem>>
    memref.store %104, %arg5[%c0_37, %c0_38] : memref<1x1xi32, #tpu.memory_space<smem>>
    return
  }
}

</mosaic_0001>

<llo_original>
// kernel: tpu_custom_call.1
$region0: #{tpu_custom_call.1}
  #allocation0 [shape = 'u32[]', space=smem, size = 0x4, offset = 0x4, fixed_abs, tag = 'smem constant byte address 0x4 - core index']
  #allocation1 [shape = 'u32[144,128]{1,0:T(1,128)}', space=vmem, size = 0x12000, scoped, tag = 'internal scratch']
  %s0 = inlined_call_operand.vmem [shape: f32[128,64], index: 0, kind: input, shape index: {}]
  %s1 = inlined_call_operand.vmem [shape: f32[64,128], index: 1, kind: input, shape index: {}]
  %s2 = inlined_call_operand.vmem [shape: s32[128,1], index: 2, kind: input, shape index: {}]
  %s3 = inlined_call_operand.vmem [shape: s32[1,128], index: 3, kind: input, shape index: {}]
  %s4 = inlined_call_operand.hbm [shape: f32[1,1], index: 4, kind: output, shape index: {0}]
  %s5 = inlined_call_operand.hbm [shape: s32[1,1], index: 5, kind: output, shape index: {1}]
  %6 = xla_tuple %s4, %s5
  %s7 = sld [smem:[#allocation0]]
  $region34: #{tpu_custom_call.1} parent=0
    _
  %s9 = ssub.s32 1, %s7
  %s10 = scalar_select 0, %s9, %s7
  $region1: #{tpu_custom_call.1} parent=0
    #allocation2 [shape = 'u8[512]{0}', space=smem, size = 0x200, scoped, tag = 'output window, operand 0, single buffered']
    #allocation3 [shape = 's32[1]{0}', space=sflag, size = 0x4, scoped, tag = 'scoped memory for tpu_custom_call.1']
    #allocation4 [shape = 'u8[512]{0}', space=smem, size = 0x200, scoped, tag = 'output window, operand 1, single buffered']
    #allocation5 [shape = 's32[1]{0}', space=sflag, size = 0x4, scoped, tag = 'scoped memory for tpu_custom_call.1']
    %11 = vsyncpa [#allocation3], 0
    %12 = vsyncpa [#allocation5], 0
    // Predicated region
    $region2: #{tpu_custom_call.1} parent=1 // pred_check
      _
    $region3: #{tpu_custom_call.1} parent=1 // pred_check_branch
      %14 = sbr.rel (0) target = $region5
    $region4: #{tpu_custom_call.1} parent=1 // pred_region
      _
    $region5: #{tpu_custom_call.1} parent=1 // pred_fallthru
      _
    // Predicated region
    $region6: #{tpu_custom_call.1} parent=1 // pred_check
      _
    $region7: #{tpu_custom_call.1} parent=1 // pred_check_branch
      %16 = sbr.rel (0) target = $region9
    $region8: #{tpu_custom_call.1} parent=1 // pred_region
      _
    $region9: #{tpu_custom_call.1} parent=1 // pred_fallthru
      _
    // Predicated region
    $region10: #{tpu_custom_call.1} parent=1 // pred_check
      _
    $region11: #{tpu_custom_call.1} parent=1 // pred_check_branch
      %18 = sbr.rel (0) target = $region13
    $region12: #{tpu_custom_call.1} parent=1 // pred_region
      _
    $region13: #{tpu_custom_call.1} parent=1 // pred_fallthru
      _
    // Predicated region
    $region14: #{tpu_custom_call.1} parent=1 // pred_check
      _
    $region15: #{tpu_custom_call.1} parent=1 // pred_check_branch
      %20 = sbr.rel (0) target = $region17
    $region16: #{tpu_custom_call.1} parent=1 // pred_region
      _
    $region17: #{tpu_custom_call.1} parent=1 // pred_fallthru
      _
    %v22 = vld [vmem:[%s0] sm:$0xff]
    %v23 = vld [vmem:[%s0 + $0x8] sm:$0xff]
    %v24 = vld [vmem:[%s0 + $0x10] sm:$0xff]
    %v25 = vld [vmem:[%s0 + $0x18] sm:$0xff]
    %v26 = vld [vmem:[%s0 + $0x20] sm:$0xff]
    %v27 = vld [vmem:[%s0 + $0x28] sm:$0xff]
    %v28 = vld [vmem:[%s0 + $0x30] sm:$0xff]
    %v29 = vld [vmem:[%s0 + $0x38] sm:$0xff]
    %v30 = vld [vmem:[%s0 + $0x40] sm:$0xff]
    %v31 = vld [vmem:[%s0 + $0x48] sm:$0xff]
    %v32 = vld [vmem:[%s0 + $0x50] sm:$0xff]
    %v33 = vld [vmem:[%s0 + $0x58] sm:$0xff]
    %v34 = vld [vmem:[%s0 + $0x60] sm:$0xff]
    %v35 = vld [vmem:[%s0 + $0x68] sm:$0xff]
    %v36 = vld [vmem:[%s0 + $0x70] sm:$0xff]
    %v37 = vld [vmem:[%s0 + $0x78] sm:$0xff]
    %v38 = vld [vmem:[%s1] sm:$0xff]
    %v39 = vld [vmem:[%s1 + $0x8] sm:$0xff]
    %v40 = vld [vmem:[%s1 + $0x10] sm:$0xff]
    %v41 = vld [vmem:[%s1 + $0x18] sm:$0xff]
    %v42 = vld [vmem:[%s1 + $0x20] sm:$0xff]
    %v43 = vld [vmem:[%s1 + $0x28] sm:$0xff]
    %v44 = vld [vmem:[%s1 + $0x30] sm:$0xff]
    %v45 = vld [vmem:[%s1 + $0x38] sm:$0xff]
    %v46 = vld [vmem:[%s2] sm:$0xff]
    %v47 = vld [vmem:[%s2 + $0x8] sm:$0xff]
    %v48 = vld [vmem:[%s2 + $0x10] sm:$0xff]
    %v49 = vld [vmem:[%s2 + $0x18] sm:$0xff]
    %v50 = vld [vmem:[%s2 + $0x20] sm:$0xff]
    %v51 = vld [vmem:[%s2 + $0x28] sm:$0xff]
    %v52 = vld [vmem:[%s2 + $0x30] sm:$0xff]
    %v53 = vld [vmem:[%s2 + $0x38] sm:$0xff]
    %v54 = vld [vmem:[%s2 + $0x40] sm:$0xff]
    %v55 = vld [vmem:[%s2 + $0x48] sm:$0xff]
    %v56 = vld [vmem:[%s2 + $0x50] sm:$0xff]
    %v57 = vld [vmem:[%s2 + $0x58] sm:$0xff]
    %v58 = vld [vmem:[%s2 + $0x60] sm:$0xff]
    %v59 = vld [vmem:[%s2 + $0x68] sm:$0xff]
    %v60 = vld [vmem:[%s2 + $0x70] sm:$0xff]
    %v61 = vld [vmem:[%s2 + $0x78] sm:$0xff]
    %v62 = vld [vmem:[%s3] sm:$0x1]
    %vm63 = vcmask 523264
    %v65 = vsel %vm63, %v22, 0
    %v68 = vsel %vm63, %v23, 0
    %v71 = vsel %vm63, %v24, 0
    %v74 = vsel %vm63, %v25, 0
    %v77 = vsel %vm63, %v26, 0
    %v80 = vsel %vm63, %v27, 0
    %v83 = vsel %vm63, %v28, 0
    %v86 = vsel %vm63, %v29, 0
    %v89 = vsel %vm63, %v30, 0
    %v92 = vsel %vm63, %v31, 0
    %v95 = vsel %vm63, %v32, 0
    %v98 = vsel %vm63, %v33, 0
    %v101 = vsel %vm63, %v34, 0
    %v104 = vsel %vm63, %v35, 0
    %v107 = vsel %vm63, %v36, 0
    %v110 = vsel %vm63, %v37, 0
    %112 = vmatprep.subr.mxu0 0.0
    %113 = vmatpush1.msra.mxu0 %v38
    %114 = vmatprep.subr.mxu0 0.0
    %115 = vmatpush1.msra.mxu0 %v39
    %116 = vmatprep.subr.mxu0 0.0
    %117 = vmatpush1.msra.mxu0 %v40
    %118 = vmatprep.subr.mxu0 0.0
    %119 = vmatpush1.msra.mxu0 %v41
    %120 = vmatprep.subr.mxu0 0.0
    %121 = vmatpush1.msra.mxu0 %v42
    %122 = vmatprep.subr.mxu0 0.0
    %123 = vmatpush1.msra.mxu0 %v43
    %124 = vmatprep.subr.mxu0 0.0
    %125 = vmatpush1.msra.mxu0 %v44
    %126 = vmatprep.subr.mxu0 0.0
    %127 = vmatpush1.msra.mxu0 %v45
    %128 = vmatprep.subr.mxu0 0.0
    %129 = vmatpush1.msra.mxu0 0.0
    %130 = vmatprep.subr.mxu0 0.0
    %131 = vmatpush1.msra.mxu0 0.0
    %132 = vmatprep.subr.mxu0 0.0
    %133 = vmatpush1.msra.mxu0 0.0
    %134 = vmatprep.subr.mxu0 0.0
    %135 = vmatpush1.msra.mxu0 0.0
    %136 = vmatprep.subr.mxu0 0.0
    %137 = vmatpush1.msra.mxu0 0.0
    %138 = vmatprep.subr.mxu0 0.0
    %139 = vmatpush1.msra.mxu0 0.0
    %140 = vmatprep.subr.mxu0 0.0
    %141 = vmatpush1.msra.mxu0 0.0
    %142 = vmatprep.subr.mxu0 0.0
    %143 = vmatpush1.msra.mxu0 0.0
    %144 = vmatprep.subr.mxu0 0.0
    %145 = vmatpush1.msra.mxu0 0.0
    %146 = vmatprep.subr.mxu0 0.0
    %147 = vmatpush1.msra.mxu0 0.0
    %148 = vmatprep.subr.mxu0 0.0
    %149 = vmatpush1.msra.mxu0 0.0
    %150 = vmatprep.subr.mxu0 0.0
    %151 = vmatpush1.msra.mxu0 0.0
    %152 = vmatprep.subr.mxu0 0.0
    %153 = vmatpush1.msra.mxu0 0.0
    %154 = vmatprep.subr.mxu0 0.0
    %155 = vmatpush1.msra.mxu0 0.0
    %156 = vmatprep.subr.mxu0 0.0
    %157 = vmatpush1.msra.mxu0 0.0
    %158 = vmatprep.subr.mxu0 0.0
    %159 = vmatpush1.msra.mxu0 0.0
    %160 = vmatprep.subr.mxu0 0.0
    %161 = vmatpush1.msra.mxu0 0.0
    %162 = vmatprep.subr.mxu0 0.0
    %163 = vmatpush1.msra.mxu0 0.0
    %164 = vmatprep.subr.mxu0 0.0
    %165 = vmatpush1.msra.mxu0 0.0
    %166 = vmatprep.subr.mxu0 0.0
    %167 = vmatpush1.msra.mxu0 0.0
    %168 = vmatprep.subr.mxu0 0.0
    %169 = vmatpush1.msra.mxu0 0.0
    %170 = vmatprep.subr.mxu0 0.0
    %171 = vmatpush1.msra.mxu0 0.0
    %172 = vmatprep.subr.mxu0 0.0
    %173 = vmatpush1.msra.mxu0 0.0
    %174 = vmatprep.subr.mxu0 0.0
    %175 = vmatpush1.msra.mxu0 0.0
    %176 = vmatprep.mubr.f32.mxu0 0.0
    %177 = vmatmul.mubr.f32.gmra.mrb[0].mxu0 %v65
    %v178 = vpop.f32.mrb[0].mxu0
    %v179 = vadd.f32 0.0, %v178
    %v180 = vpop.f32.mrb[0].mxu0
    %181 = vmatprep.mubr.f32.mxu0 0.0
    %182 = vmatmul.mubr.f32.gmra.mrb[0].mxu0 %v68
    %v183 = vpop.f32.mrb[0].mxu0
    %v184 = vadd.f32 0.0, %v183
    %v185 = vpop.f32.mrb[0].mxu0
    %186 = vmatprep.mubr.f32.mxu0 0.0
    %187 = vmatmul.mubr.f32.gmra.mrb[0].mxu0 %v71
    %v188 = vpop.f32.mrb[0].mxu0
    %v189 = vadd.f32 0.0, %v188
    %v190 = vpop.f32.mrb[0].mxu0
    %191 = vmatprep.mubr.f32.mxu0 0.0
    %192 = vmatmul.mubr.f32.gmra.mrb[0].mxu0 %v74
    %v193 = vpop.f32.mrb[0].mxu0
    %v194 = vadd.f32 0.0, %v193
    %v195 = vpop.f32.mrb[0].mxu0
    %196 = vmatprep.mubr.f32.mxu0 0.0
    %197 = vmatmul.mubr.f32.gmra.mrb[0].mxu0 %v77
    %v198 = vpop.f32.mrb[0].mxu0
    %v199 = vadd.f32 0.0, %v198
    %v200 = vpop.f32.mrb[0].mxu0
    %201 = vmatprep.mubr.f32.mxu0 0.0
    %202 = vmatmul.mubr.f32.gmra.mrb[0].mxu0 %v80
    %v203 = vpop.f32.mrb[0].mxu0
    %v204 = vadd.f32 0.0, %v203
    %v205 = vpop.f32.mrb[0].mxu0
    %206 = vmatprep.mubr.f32.mxu0 0.0
    %207 = vmatmul.mubr.f32.gmra.mrb[0].mxu0 %v83
    %v208 = vpop.f32.mrb[0].mxu0
    %v209 = vadd.f32 0.0, %v208
    %v210 = vpop.f32.mrb[0].mxu0
    %211 = vmatprep.mubr.f32.mxu0 0.0
    %212 = vmatmul.mubr.f32.gmra.mrb[0].mxu0 %v86
    %v213 = vpop.f32.mrb[0].mxu0
    %v214 = vadd.f32 0.0, %v213
    %v215 = vpop.f32.mrb[0].mxu0
    %216 = vmatprep.mubr.f32.mxu0 0.0
    %217 = vmatmul.mubr.f32.gmra.mrb[0].mxu0 %v89
    %v218 = vpop.f32.mrb[0].mxu0
    %v219 = vadd.f32 0.0, %v218
    %v220 = vpop.f32.mrb[0].mxu0
    %221 = vmatprep.mubr.f32.mxu0 0.0
    %222 = vmatmul.mubr.f32.gmra.mrb[0].mxu0 %v92
    %v223 = vpop.f32.mrb[0].mxu0
    %v224 = vadd.f32 0.0, %v223
    %v225 = vpop.f32.mrb[0].mxu0
    %226 = vmatprep.mubr.f32.mxu0 0.0
    %227 = vmatmul.mubr.f32.gmra.mrb[0].mxu0 %v95
    %v228 = vpop.f32.mrb[0].mxu0
    %v229 = vadd.f32 0.0, %v228
    %v230 = vpop.f32.mrb[0].mxu0
    %231 = vmatprep.mubr.f32.mxu0 0.0
    %232 = vmatmul.mubr.f32.gmra.mrb[0].mxu0 %v98
    %v233 = vpop.f32.mrb[0].mxu0
    %v234 = vadd.f32 0.0, %v233
    %v235 = vpop.f32.mrb[0].mxu0
    %236 = vmatprep.mubr.f32.mxu0 0.0
    %237 = vmatmul.mubr.f32.gmra.mrb[0].mxu0 %v101
    %v238 = vpop.f32.mrb[0].mxu0
    %v239 = vadd.f32 0.0, %v238
    %v240 = vpop.f32.mrb[0].mxu0
    %241 = vmatprep.mubr.f32.mxu0 0.0
    %242 = vmatmul.mubr.f32.gmra.mrb[0].mxu0 %v104
    %v243 = vpop.f32.mrb[0].mxu0
    %v244 = vadd.f32 0.0, %v243
    %v245 = vpop.f32.mrb[0].mxu0
    %246 = vmatprep.mubr.f32.mxu0 0.0
    %247 = vmatmul.mubr.f32.gmra.mrb[0].mxu0 %v107
    %v248 = vpop.f32.mrb[0].mxu0
    %v249 = vadd.f32 0.0, %v248
    %v250 = vpop.f32.mrb[0].mxu0
    %251 = vmatprep.mubr.f32.mxu0 0.0
    %252 = vmatmul.mubr.f32.gmra.mrb[0].mxu0 %v110
    %v253 = vpop.f32.mrb[0].mxu0
    %v254 = vadd.f32 0.0, %v253
    %v255 = vpop.f32.mrb[0].mxu0
    %256 = vdwg.mxu0
    %v257 = vmul.f32 %v38, %v38
    %v258 = vmul.f32 %v39, %v39
    %v259 = vmul.f32 %v40, %v40
    %v260 = vmul.f32 %v41, %v41
    %v261 = vmul.f32 %v42, %v42
    %v262 = vmul.f32 %v43, %v43
    %v263 = vmul.f32 %v44, %v44
    %v264 = vmul.f32 %v45, %v45
    %v265 = vadd.f32 %v257, %v258
    %v266 = vadd.f32 %v265, %v259
    %v267 = vadd.f32 %v266, %v260
    %v268 = vadd.f32 %v267, %v261
    %v269 = vadd.f32 %v268, %v262
    %v270 = vadd.f32 %v269, %v263
    %v271 = vadd.f32 %v270, %v264
    %v272 = vrot.slane %v271, 4
    %v273 = vadd.f32 %v271, %v272
    %v274 = vrot.slane %v273, 2
    %v275 = vadd.f32 %v273, %v274
    %v276 = vrot.slane %v275, 1
    %v277 = vadd.f32 %v275, %v276
    %v278 = vmul.f32 %v179, 2.0
    %v279 = vmul.f32 %v184, 2.0
    %v280 = vmul.f32 %v189, 2.0
    %v281 = vmul.f32 %v194, 2.0
    %v282 = vmul.f32 %v199, 2.0
    %v283 = vmul.f32 %v204, 2.0
    %v284 = vmul.f32 %v209, 2.0
    %v285 = vmul.f32 %v214, 2.0
    %v286 = vmul.f32 %v219, 2.0
    %v287 = vmul.f32 %v224, 2.0
    %v288 = vmul.f32 %v229, 2.0
    %v289 = vmul.f32 %v234, 2.0
    %v290 = vmul.f32 %v239, 2.0
    %v291 = vmul.f32 %v244, 2.0
    %v292 = vmul.f32 %v249, 2.0
    %v293 = vmul.f32 %v254, 2.0
    %v294 = vsub.f32 %v277, %v278
    %v295 = vsub.f32 %v277, %v279
    %v296 = vsub.f32 %v277, %v280
    %v297 = vsub.f32 %v277, %v281
    %v298 = vsub.f32 %v277, %v282
    %v299 = vsub.f32 %v277, %v283
    %v300 = vsub.f32 %v277, %v284
    %v301 = vsub.f32 %v277, %v285
    %v302 = vsub.f32 %v277, %v286
    %v303 = vsub.f32 %v277, %v287
    %v304 = vsub.f32 %v277, %v288
    %v305 = vsub.f32 %v277, %v289
    %v306 = vsub.f32 %v277, %v290
    %v307 = vsub.f32 %v277, %v291
    %v308 = vsub.f32 %v277, %v292
    %v309 = vsub.f32 %v277, %v293
    %v310 = vmul.f32 %v22, %v22
    %v311 = vmul.f32 %v23, %v23
    %v312 = vmul.f32 %v24, %v24
    %v313 = vmul.f32 %v25, %v25
    %v314 = vmul.f32 %v26, %v26
    %v315 = vmul.f32 %v27, %v27
    %v316 = vmul.f32 %v28, %v28
    %v317 = vmul.f32 %v29, %v29
    %v318 = vmul.f32 %v30, %v30
    %v319 = vmul.f32 %v31, %v31
    %v320 = vmul.f32 %v32, %v32
    %v321 = vmul.f32 %v33, %v33
    %v322 = vmul.f32 %v34, %v34
    %v323 = vmul.f32 %v35, %v35
    %v324 = vmul.f32 %v36, %v36
    %v325 = vmul.f32 %v37, %v37
    %v326 = vsel %vm63, %v310, 0.0
    %327 = vadd.xlane.f32.xlu0 %v326
    %v328 = vpop.xlane.xlu0 %327
    %v329 = vsel %vm63, %v311, 0.0
    %330 = vadd.xlane.f32.xlu0 %v329
    %v331 = vpop.xlane.xlu0 %330
    %v332 = vsel %vm63, %v312, 0.0
    %333 = vadd.xlane.f32.xlu0 %v332
    %v334 = vpop.xlane.xlu0 %333
    %v335 = vsel %vm63, %v313, 0.0
    %336 = vadd.xlane.f32.xlu0 %v335
    %v337 = vpop.xlane.xlu0 %336
    %v338 = vsel %vm63, %v314, 0.0
    %339 = vadd.xlane.f32.xlu0 %v338
    %v340 = vpop.xlane.xlu0 %339
    %v341 = vsel %vm63, %v315, 0.0
    %342 = vadd.xlane.f32.xlu0 %v341
    %v343 = vpop.xlane.xlu0 %342
    %v344 = vsel %vm63, %v316, 0.0
    %345 = vadd.xlane.f32.xlu0 %v344
    %v346 = vpop.xlane.xlu0 %345
    %v347 = vsel %vm63, %v317, 0.0
    %348 = vadd.xlane.f32.xlu0 %v347
    %v349 = vpop.xlane.xlu0 %348
    %v350 = vsel %vm63, %v318, 0.0
    %351 = vadd.xlane.f32.xlu0 %v350
    %v352 = vpop.xlane.xlu0 %351
    %v353 = vsel %vm63, %v319, 0.0
    %354 = vadd.xlane.f32.xlu0 %v353
    %v355 = vpop.xlane.xlu0 %354
    %v356 = vsel %vm63, %v320, 0.0
    %357 = vadd.xlane.f32.xlu0 %v356
    %v358 = vpop.xlane.xlu0 %357
    %v359 = vsel %vm63, %v321, 0.0
    %360 = vadd.xlane.f32.xlu0 %v359
    %v361 = vpop.xlane.xlu0 %360
    %v362 = vsel %vm63, %v322, 0.0
    %363 = vadd.xlane.f32.xlu0 %v362
    %v364 = vpop.xlane.xlu0 %363
    %v365 = vsel %vm63, %v323, 0.0
    %366 = vadd.xlane.f32.xlu0 %v365
    %v367 = vpop.xlane.xlu0 %366
    %v368 = vsel %vm63, %v324, 0.0
    %369 = vadd.xlane.f32.xlu0 %v368
    %v370 = vpop.xlane.xlu0 %369
    %v371 = vsel %vm63, %v325, 0.0
    %372 = vadd.xlane.f32.xlu0 %v371
    %v373 = vpop.xlane.xlu0 %372
    %374 = vset.pattern.permute.xlu0 0
    %375 = vperm.xlu0 %374, %v46
    %v376 = vpop.permute.xlu0 %375
    %377 = vset.pattern.permute.xlu0 0
    %378 = vperm.xlu0 %377, %v47
    %v379 = vpop.permute.xlu0 %378
    %380 = vset.pattern.permute.xlu0 0
    %381 = vperm.xlu0 %380, %v48
    %v382 = vpop.permute.xlu0 %381
    %383 = vset.pattern.permute.xlu0 0
    %384 = vperm.xlu0 %383, %v49
    %v385 = vpop.permute.xlu0 %384
    %386 = vset.pattern.permute.xlu0 0
    %387 = vperm.xlu0 %386, %v50
    %v388 = vpop.permute.xlu0 %387
    %389 = vset.pattern.permute.xlu0 0
    %390 = vperm.xlu0 %389, %v51
    %v391 = vpop.permute.xlu0 %390
    %392 = vset.pattern.permute.xlu0 0
    %393 = vperm.xlu0 %392, %v52
    %v394 = vpop.permute.xlu0 %393
    %395 = vset.pattern.permute.xlu0 0
    %396 = vperm.xlu0 %395, %v53
    %v397 = vpop.permute.xlu0 %396
    %398 = vset.pattern.permute.xlu0 0
    %399 = vperm.xlu0 %398, %v54
    %v400 = vpop.permute.xlu0 %399
    %401 = vset.pattern.permute.xlu0 0
    %402 = vperm.xlu0 %401, %v55
    %v403 = vpop.permute.xlu0 %402
    %404 = vset.pattern.permute.xlu0 0
    %405 = vperm.xlu0 %404, %v56
    %v406 = vpop.permute.xlu0 %405
    %407 = vset.pattern.permute.xlu0 0
    %408 = vperm.xlu0 %407, %v57
    %v409 = vpop.permute.xlu0 %408
    %410 = vset.pattern.permute.xlu0 0
    %411 = vperm.xlu0 %410, %v58
    %v412 = vpop.permute.xlu0 %411
    %413 = vset.pattern.permute.xlu0 0
    %414 = vperm.xlu0 %413, %v59
    %v415 = vpop.permute.xlu0 %414
    %416 = vset.pattern.permute.xlu0 0
    %417 = vperm.xlu0 %416, %v60
    %v418 = vpop.permute.xlu0 %417
    %419 = vset.pattern.permute.xlu0 0
    %420 = vperm.xlu0 %419, %v61
    %v421 = vpop.permute.xlu0 %420
    %v422 = vlaneseq
    %v423 = vshrl.u32 %v422, 7
    %v424 = vsub.s32 0, %v423
    %v425 = vrot.slane %v62, %v424
    %vm426 = vcmp.eq.s32.totalorder %v376, %v425
    %vm427 = vcmp.eq.s32.totalorder %v379, %v425
    %vm428 = vcmp.eq.s32.totalorder %v382, %v425
    %vm429 = vcmp.eq.s32.totalorder %v385, %v425
    %vm430 = vcmp.eq.s32.totalorder %v388, %v425
    %vm431 = vcmp.eq.s32.totalorder %v391, %v425
    %vm432 = vcmp.eq.s32.totalorder %v394, %v425
    %vm433 = vcmp.eq.s32.totalorder %v397, %v425
    %vm434 = vcmp.eq.s32.totalorder %v400, %v425
    %vm435 = vcmp.eq.s32.totalorder %v403, %v425
    %vm436 = vcmp.eq.s32.totalorder %v406, %v425
    %vm437 = vcmp.eq.s32.totalorder %v409, %v425
    %vm438 = vcmp.eq.s32.totalorder %v412, %v425
    %vm439 = vcmp.eq.s32.totalorder %v415, %v425
    %vm440 = vcmp.eq.s32.totalorder %v418, %v425
    %vm441 = vcmp.eq.s32.totalorder %v421, %v425
    %vm442 = vmxor %vm426, 1
    %vm443 = vmxor %vm427, 1
    %vm444 = vmxor %vm428, 1
    %vm445 = vmxor %vm429, 1
    %vm446 = vmxor %vm430, 1
    %vm447 = vmxor %vm431, 1
    %vm448 = vmxor %vm432, 1
    %vm449 = vmxor %vm433, 1
    %vm450 = vmxor %vm434, 1
    %vm451 = vmxor %vm435, 1
    %vm452 = vmxor %vm436, 1
    %vm453 = vmxor %vm437, 1
    %vm454 = vmxor %vm438, 1
    %vm455 = vmxor %vm439, 1
    %vm456 = vmxor %vm440, 1
    %vm457 = vmxor %vm441, 1
    %v458 = vsel %vm426, %v294, -inf
    %v459 = vsel %vm427, %v295, -inf
    %v460 = vsel %vm428, %v296, -inf
    %v461 = vsel %vm429, %v297, -inf
    %v462 = vsel %vm430, %v298, -inf
    %v463 = vsel %vm431, %v299, -inf
    %v464 = vsel %vm432, %v300, -inf
    %v465 = vsel %vm433, %v301, -inf
    %v466 = vsel %vm434, %v302, -inf
    %v467 = vsel %vm435, %v303, -inf
    %v468 = vsel %vm436, %v304, -inf
    %v469 = vsel %vm437, %v305, -inf
    %v470 = vsel %vm438, %v306, -inf
    %v471 = vsel %vm439, %v307, -inf
    %v472 = vsel %vm440, %v308, -inf
    %v473 = vsel %vm441, %v309, -inf
    %474 = vmax.xlane.f32.xlu0 %v458
    %v475 = vpop.xlane.xlu0 %474
    %476 = vmax.xlane.f32.xlu0 %v459
    %v477 = vpop.xlane.xlu0 %476
    %478 = vmax.xlane.f32.xlu0 %v460
    %v479 = vpop.xlane.xlu0 %478
    %480 = vmax.xlane.f32.xlu0 %v461
    %v481 = vpop.xlane.xlu0 %480
    %482 = vmax.xlane.f32.xlu0 %v462
    %v483 = vpop.xlane.xlu0 %482
    %484 = vmax.xlane.f32.xlu0 %v463
    %v485 = vpop.xlane.xlu0 %484
    %486 = vmax.xlane.f32.xlu0 %v464
    %v487 = vpop.xlane.xlu0 %486
    %488 = vmax.xlane.f32.xlu0 %v465
    %v489 = vpop.xlane.xlu0 %488
    %490 = vmax.xlane.f32.xlu0 %v466
    %v491 = vpop.xlane.xlu0 %490
    %492 = vmax.xlane.f32.xlu0 %v467
    %v493 = vpop.xlane.xlu0 %492
    %494 = vmax.xlane.f32.xlu0 %v468
    %v495 = vpop.xlane.xlu0 %494
    %496 = vmax.xlane.f32.xlu0 %v469
    %v497 = vpop.xlane.xlu0 %496
    %498 = vmax.xlane.f32.xlu0 %v470
    %v499 = vpop.xlane.xlu0 %498
    %500 = vmax.xlane.f32.xlu0 %v471
    %v501 = vpop.xlane.xlu0 %500
    %502 = vmax.xlane.f32.xlu0 %v472
    %v503 = vpop.xlane.xlu0 %502
    %504 = vmax.xlane.f32.xlu0 %v473
    %v505 = vpop.xlane.xlu0 %504
    %v506 = vadd.f32 %v328, %v475
    %v507 = vadd.f32 %v331, %v477
    %v508 = vadd.f32 %v334, %v479
    %v509 = vadd.f32 %v337, %v481
    %v510 = vadd.f32 %v340, %v483
    %v511 = vadd.f32 %v343, %v485
    %v512 = vadd.f32 %v346, %v487
    %v513 = vadd.f32 %v349, %v489
    %v514 = vadd.f32 %v352, %v491
    %v515 = vadd.f32 %v355, %v493
    %v516 = vadd.f32 %v358, %v495
    %v517 = vadd.f32 %v361, %v497
    %v518 = vadd.f32 %v364, %v499
    %v519 = vadd.f32 %v367, %v501
    %v520 = vadd.f32 %v370, %v503
    %v521 = vadd.f32 %v373, %v505
    %v522 = vmax.f32 %v506, 1e-12
    %v523 = vmax.f32 %v507, 1e-12
    %v524 = vmax.f32 %v508, 1e-12
    %v525 = vmax.f32 %v509, 1e-12
    %v526 = vmax.f32 %v510, 1e-12
    %v527 = vmax.f32 %v511, 1e-12
    %v528 = vmax.f32 %v512, 1e-12
    %v529 = vmax.f32 %v513, 1e-12
    %v530 = vmax.f32 %v514, 1e-12
    %v531 = vmax.f32 %v515, 1e-12
    %v532 = vmax.f32 %v516, 1e-12
    %v533 = vmax.f32 %v517, 1e-12
    %v534 = vmax.f32 %v518, 1e-12
    %v535 = vmax.f32 %v519, 1e-12
    %v536 = vmax.f32 %v520, 1e-12
    %v537 = vmax.f32 %v521, 1e-12
    %v538 = vrsqrt.pop %v522
    %v539 = vmul.f32 %v522, %v538
    %vm540 = vcmp.eq.f32.partialorder %v522, inf
    %v541 = vsel %vm540, %v522, %v539
    %vm542 = vcmp.eq.f32.partialorder %v522, 0.0
    %v543 = vand.u32 %v522, 2147483648
    %v544 = vsel %vm542, %v543, %v541
    %v545 = vrsqrt.pop %v523
    %v546 = vmul.f32 %v523, %v545
    %vm547 = vcmp.eq.f32.partialorder %v523, inf
    %v548 = vsel %vm547, %v523, %v546
    %vm549 = vcmp.eq.f32.partialorder %v523, 0.0
    %v550 = vand.u32 %v523, 2147483648
    %v551 = vsel %vm549, %v550, %v548
    %v552 = vrsqrt.pop %v524
    %v553 = vmul.f32 %v524, %v552
    %vm554 = vcmp.eq.f32.partialorder %v524, inf
    %v555 = vsel %vm554, %v524, %v553
    %vm556 = vcmp.eq.f32.partialorder %v524, 0.0
    %v557 = vand.u32 %v524, 2147483648
    %v558 = vsel %vm556, %v557, %v555
    %v559 = vrsqrt.pop %v525
    %v560 = vmul.f32 %v525, %v559
    %vm561 = vcmp.eq.f32.partialorder %v525, inf
    %v562 = vsel %vm561, %v525, %v560
    %vm563 = vcmp.eq.f32.partialorder %v525, 0.0
    %v564 = vand.u32 %v525, 2147483648
    %v565 = vsel %vm563, %v564, %v562
    %v566 = vrsqrt.pop %v526
    %v567 = vmul.f32 %v526, %v566
    %vm568 = vcmp.eq.f32.partialorder %v526, inf
    %v569 = vsel %vm568, %v526, %v567
    %vm570 = vcmp.eq.f32.partialorder %v526, 0.0
    %v571 = vand.u32 %v526, 2147483648
    %v572 = vsel %vm570, %v571, %v569
    %v573 = vrsqrt.pop %v527
    %v574 = vmul.f32 %v527, %v573
    %vm575 = vcmp.eq.f32.partialorder %v527, inf
    %v576 = vsel %vm575, %v527, %v574
    %vm577 = vcmp.eq.f32.partialorder %v527, 0.0
    %v578 = vand.u32 %v527, 2147483648
    %v579 = vsel %vm577, %v578, %v576
    %v580 = vrsqrt.pop %v528
    %v581 = vmul.f32 %v528, %v580
    %vm582 = vcmp.eq.f32.partialorder %v528, inf
    %v583 = vsel %vm582, %v528, %v581
    %vm584 = vcmp.eq.f32.partialorder %v528, 0.0
    %v585 = vand.u32 %v528, 2147483648
    %v586 = vsel %vm584, %v585, %v583
    %v587 = vrsqrt.pop %v529
    %v588 = vmul.f32 %v529, %v587
    %vm589 = vcmp.eq.f32.partialorder %v529, inf
    %v590 = vsel %vm589, %v529, %v588
    %vm591 = vcmp.eq.f32.partialorder %v529, 0.0
    %v592 = vand.u32 %v529, 2147483648
    %v593 = vsel %vm591, %v592, %v590
    %v594 = vrsqrt.pop %v530
    %v595 = vmul.f32 %v530, %v594
    %vm596 = vcmp.eq.f32.partialorder %v530, inf
    %v597 = vsel %vm596, %v530, %v595
    %vm598 = vcmp.eq.f32.partialorder %v530, 0.0
    %v599 = vand.u32 %v530, 2147483648
    %v600 = vsel %vm598, %v599, %v597
    %v601 = vrsqrt.pop %v531
    %v602 = vmul.f32 %v531, %v601
    %vm603 = vcmp.eq.f32.partialorder %v531, inf
    %v604 = vsel %vm603, %v531, %v602
    %vm605 = vcmp.eq.f32.partialorder %v531, 0.0
    %v606 = vand.u32 %v531, 2147483648
    %v607 = vsel %vm605, %v606, %v604
    %v608 = vrsqrt.pop %v532
    %v609 = vmul.f32 %v532, %v608
    %vm610 = vcmp.eq.f32.partialorder %v532, inf
    %v611 = vsel %vm610, %v532, %v609
    %vm612 = vcmp.eq.f32.partialorder %v532, 0.0
    %v613 = vand.u32 %v532, 2147483648
    %v614 = vsel %vm612, %v613, %v611
    %v615 = vrsqrt.pop %v533
    %v616 = vmul.f32 %v533, %v615
    %vm617 = vcmp.eq.f32.partialorder %v533, inf
    %v618 = vsel %vm617, %v533, %v616
    %vm619 = vcmp.eq.f32.partialorder %v533, 0.0
    %v620 = vand.u32 %v533, 2147483648
    %v621 = vsel %vm619, %v620, %v618
    %v622 = vrsqrt.pop %v534
    %v623 = vmul.f32 %v534, %v622
    %vm624 = vcmp.eq.f32.partialorder %v534, inf
    %v625 = vsel %vm624, %v534, %v623
    %vm626 = vcmp.eq.f32.partialorder %v534, 0.0
    %v627 = vand.u32 %v534, 2147483648
    %v628 = vsel %vm626, %v627, %v625
    %v629 = vrsqrt.pop %v535
    %v630 = vmul.f32 %v535, %v629
    %vm631 = vcmp.eq.f32.partialorder %v535, inf
    %v632 = vsel %vm631, %v535, %v630
    %vm633 = vcmp.eq.f32.partialorder %v535, 0.0
    %v634 = vand.u32 %v535, 2147483648
    %v635 = vsel %vm633, %v634, %v632
    %v636 = vrsqrt.pop %v536
    %v637 = vmul.f32 %v536, %v636
    %vm638 = vcmp.eq.f32.partialorder %v536, inf
    %v639 = vsel %vm638, %v536, %v637
    %vm640 = vcmp.eq.f32.partialorder %v536, 0.0
    %v641 = vand.u32 %v536, 2147483648
    %v642 = vsel %vm640, %v641, %v639
    %v643 = vrsqrt.pop %v537
    %v644 = vmul.f32 %v537, %v643
    %vm645 = vcmp.eq.f32.partialorder %v537, inf
    %v646 = vsel %vm645, %v537, %v644
    %vm647 = vcmp.eq.f32.partialorder %v537, 0.0
    %v648 = vand.u32 %v537, 2147483648
    %v649 = vsel %vm647, %v648, %v646
    %v650 = vlaneseq
    %v651 = vshrl.u32 %v650, 7
    %v652 = vadd.s32 %v651, 8
    %v653 = vadd.s32 %v651, 16
    %v654 = vadd.s32 %v651, 24
    %v655 = vadd.s32 %v651, 32
    %v656 = vadd.s32 %v651, 40
    %v657 = vadd.s32 %v651, 48
    %v658 = vadd.s32 %v651, 56
    %v659 = vadd.s32 %v651, 64
    %v660 = vadd.s32 %v651, 72
    %v661 = vadd.s32 %v651, 80
    %v662 = vadd.s32 %v651, 88
    %v663 = vadd.s32 %v651, 96
    %v664 = vadd.s32 %v651, 104
    %v665 = vadd.s32 %v651, 112
    %v666 = vadd.s32 %v651, 120
    %v667 = vlaneseq
    %v668 = vand.u32 %v667, 127
    %vm669 = vcmp.lt.s32.totalorder %v651, %v668
    %vm670 = vcmp.lt.s32.totalorder %v652, %v668
    %vm671 = vcmp.lt.s32.totalorder %v653, %v668
    %vm672 = vcmp.lt.s32.totalorder %v654, %v668
    %vm673 = vcmp.lt.s32.totalorder %v655, %v668
    %vm674 = vcmp.lt.s32.totalorder %v656, %v668
    %vm675 = vcmp.lt.s32.totalorder %v657, %v668
    %vm676 = vcmp.lt.s32.totalorder %v658, %v668
    %vm677 = vcmp.lt.s32.totalorder %v659, %v668
    %vm678 = vcmp.lt.s32.totalorder %v660, %v668
    %vm679 = vcmp.lt.s32.totalorder %v661, %v668
    %vm680 = vcmp.lt.s32.totalorder %v662, %v668
    %vm681 = vcmp.lt.s32.totalorder %v663, %v668
    %vm682 = vcmp.lt.s32.totalorder %v664, %v668
    %vm683 = vcmp.lt.s32.totalorder %v665, %v668
    %vm684 = vcmp.lt.s32.totalorder %v666, %v668
    %v685 = vsel %vm669, 1, 0
    %v686 = vsel %vm670, 1, 0
    %v687 = vsel %vm671, 1, 0
    %v688 = vsel %vm672, 1, 0
    %v689 = vsel %vm673, 1, 0
    %v690 = vsel %vm674, 1, 0
    %v691 = vsel %vm675, 1, 0
    %v692 = vsel %vm676, 1, 0
    %v693 = vsel %vm677, 1, 0
    %v694 = vsel %vm678, 1, 0
    %v695 = vsel %vm679, 1, 0
    %v696 = vsel %vm680, 1, 0
    %v697 = vsel %vm681, 1, 0
    %v698 = vsel %vm682, 1, 0
    %v699 = vsel %vm683, 1, 0
    %v700 = vsel %vm684, 1, 0
    %v701 = vcvt.s32.f32 %v685
    %v702 = vcvt.s32.f32 %v686
    %v703 = vcvt.s32.f32 %v687
    %v704 = vcvt.s32.f32 %v688
    %v705 = vcvt.s32.f32 %v689
    %v706 = vcvt.s32.f32 %v690
    %v707 = vcvt.s32.f32 %v691
    %v708 = vcvt.s32.f32 %v692
    %v709 = vcvt.s32.f32 %v693
    %v710 = vcvt.s32.f32 %v694
    %v711 = vcvt.s32.f32 %v695
    %v712 = vcvt.s32.f32 %v696
    %v713 = vcvt.s32.f32 %v697
    %v714 = vcvt.s32.f32 %v698
    %v715 = vcvt.s32.f32 %v699
    %v716 = vcvt.s32.f32 %v700
    %v717 = vpack.c.bf16 %v702, %v701
    %v718 = vpack.c.bf16 %v704, %v703
    %v719 = vpack.c.bf16 %v706, %v705
    %v720 = vpack.c.bf16 %v708, %v707
    %v721 = vpack.c.bf16 %v710, %v709
    %v722 = vpack.c.bf16 %v712, %v711
    %v723 = vpack.c.bf16 %v714, %v713
    %v724 = vpack.c.bf16 %v716, %v715
    %v725 = vsel %vm442, 1, 0
    %v726 = vsel %vm443, 1, 0
    %v727 = vsel %vm444, 1, 0
    %v728 = vsel %vm445, 1, 0
    %v729 = vsel %vm446, 1, 0
    %v730 = vsel %vm447, 1, 0
    %v731 = vsel %vm448, 1, 0
    %v732 = vsel %vm449, 1, 0
    %v733 = vsel %vm450, 1, 0
    %v734 = vsel %vm451, 1, 0
    %v735 = vsel %vm452, 1, 0
    %v736 = vsel %vm453, 1, 0
    %v737 = vsel %vm454, 1, 0
    %v738 = vsel %vm455, 1, 0
    %v739 = vsel %vm456, 1, 0
    %v740 = vsel %vm457, 1, 0
    %v741 = vcvt.s32.f32 %v725
    %v742 = vcvt.s32.f32 %v726
    %v743 = vcvt.s32.f32 %v727
    %v744 = vcvt.s32.f32 %v728
    %v745 = vcvt.s32.f32 %v729
    %v746 = vcvt.s32.f32 %v730
    %v747 = vcvt.s32.f32 %v731
    %v748 = vcvt.s32.f32 %v732
    %v749 = vcvt.s32.f32 %v733
    %v750 = vcvt.s32.f32 %v734
    %v751 = vcvt.s32.f32 %v735
    %v752 = vcvt.s32.f32 %v736
    %v753 = vcvt.s32.f32 %v737
    %v754 = vcvt.s32.f32 %v738
    %v755 = vcvt.s32.f32 %v739
    %v756 = vcvt.s32.f32 %v740
    %v757 = vpack.c.bf16 %v742, %v741
    %v758 = vpack.c.bf16 %v744, %v743
    %v759 = vpack.c.bf16 %v746, %v745
    %v760 = vpack.c.bf16 %v748, %v747
    %v761 = vpack.c.bf16 %v750, %v749
    %v762 = vpack.c.bf16 %v752, %v751
    %v763 = vpack.c.bf16 %v754, %v753
    %v764 = vpack.c.bf16 %v756, %v755
    %765 = vmatprep.subr.bf16.mxu0 0
    %766 = vmatpush1.bf16.msra.mxu0 %v717
    %767 = vmatprep.subr.bf16.mxu0 0
    %768 = vmatpush1.bf16.msra.mxu0 %v718
    %769 = vmatprep.subr.bf16.mxu0 0
    %770 = vmatpush1.bf16.msra.mxu0 %v719
    %771 = vmatprep.subr.bf16.mxu0 0
    %772 = vmatpush1.bf16.msra.mxu0 %v720
    %773 = vmatprep.subr.bf16.mxu0 0
    %774 = vmatpush1.bf16.msra.mxu0 %v721
    %775 = vmatprep.subr.bf16.mxu0 0
    %776 = vmatpush1.bf16.msra.mxu0 %v722
    %777 = vmatprep.subr.bf16.mxu0 0
    %778 = vmatpush1.bf16.msra.mxu0 %v723
    %779 = vmatprep.subr.bf16.mxu0 0
    %780 = vmatpush1.bf16.msra.mxu0 %v724
    %781 = vmatprep.subr.bf16.mxu0 0
    %782 = vmatpush1.bf16.msra.mxu0 0
    %783 = vmatprep.subr.bf16.mxu0 0
    %784 = vmatpush1.bf16.msra.mxu0 0
    %785 = vmatprep.subr.bf16.mxu0 0
    %786 = vmatpush1.bf16.msra.mxu0 0
    %787 = vmatprep.subr.bf16.mxu0 0
    %788 = vmatpush1.bf16.msra.mxu0 0
    %789 = vmatprep.subr.bf16.mxu0 0
    %790 = vmatpush1.bf16.msra.mxu0 0
    %791 = vmatprep.subr.bf16.mxu0 0
    %792 = vmatpush1.bf16.msra.mxu0 0
    %793 = vmatprep.subr.bf16.mxu0 0
    %794 = vmatpush1.bf16.msra.mxu0 0
    %795 = vmatprep.subr.bf16.mxu0 0
    %796 = vmatpush1.bf16.msra.mxu0 0
    %797 = vmatprep.mubr.bf16.mxu0 0
    %798 = vmatmul.mubr.bf16.gmra.mrb[0].mxu0 %v757
    %v799 = vpop.f32.mrb[0].mxu0
    %v800 = vadd.f32 0.0, %v799
    %v801 = vpop.f32.mrb[0].mxu0
    %v802 = vpop.f32.mrb[0].mxu0
    %v803 = vadd.f32 0.0, %v802
    %v804 = vpop.f32.mrb[0].mxu0
    %805 = vmatprep.mubr.bf16.mxu0 0
    %806 = vmatmul.mubr.bf16.gmra.mrb[0].mxu0 %v758
    %v807 = vpop.f32.mrb[0].mxu0
    %v808 = vadd.f32 0.0, %v807
    %v809 = vpop.f32.mrb[0].mxu0
    %v810 = vpop.f32.mrb[0].mxu0
    %v811 = vadd.f32 0.0, %v810
    %v812 = vpop.f32.mrb[0].mxu0
    %813 = vmatprep.mubr.bf16.mxu0 0
    %814 = vmatmul.mubr.bf16.gmra.mrb[0].mxu0 %v759
    %v815 = vpop.f32.mrb[0].mxu0
    %v816 = vadd.f32 0.0, %v815
    %v817 = vpop.f32.mrb[0].mxu0
    %v818 = vpop.f32.mrb[0].mxu0
    %v819 = vadd.f32 0.0, %v818
    %v820 = vpop.f32.mrb[0].mxu0
    %821 = vmatprep.mubr.bf16.mxu0 0
    %822 = vmatmul.mubr.bf16.gmra.mrb[0].mxu0 %v760
    %v823 = vpop.f32.mrb[0].mxu0
    %v824 = vadd.f32 0.0, %v823
    %v825 = vpop.f32.mrb[0].mxu0
    %v826 = vpop.f32.mrb[0].mxu0
    %v827 = vadd.f32 0.0, %v826
    %v828 = vpop.f32.mrb[0].mxu0
    %829 = vmatprep.mubr.bf16.mxu0 0
    %830 = vmatmul.mubr.bf16.gmra.mrb[0].mxu0 %v761
    %v831 = vpop.f32.mrb[0].mxu0
    %v832 = vadd.f32 0.0, %v831
    %v833 = vpop.f32.mrb[0].mxu0
    %v834 = vpop.f32.mrb[0].mxu0
    %v835 = vadd.f32 0.0, %v834
    %v836 = vpop.f32.mrb[0].mxu0
    %837 = vmatprep.mubr.bf16.mxu0 0
    %838 = vmatmul.mubr.bf16.gmra.mrb[0].mxu0 %v762
    %v839 = vpop.f32.mrb[0].mxu0
    %v840 = vadd.f32 0.0, %v839
    %v841 = vpop.f32.mrb[0].mxu0
    %v842 = vpop.f32.mrb[0].mxu0
    %v843 = vadd.f32 0.0, %v842
    %v844 = vpop.f32.mrb[0].mxu0
    %845 = vmatprep.mubr.bf16.mxu0 0
    %846 = vmatmul.mubr.bf16.gmra.mrb[0].mxu0 %v763
    %v847 = vpop.f32.mrb[0].mxu0
    %v848 = vadd.f32 0.0, %v847
    %v849 = vpop.f32.mrb[0].mxu0
    %v850 = vpop.f32.mrb[0].mxu0
    %v851 = vadd.f32 0.0, %v850
    %v852 = vpop.f32.mrb[0].mxu0
    %853 = vmatprep.mubr.bf16.mxu0 0
    %854 = vmatmul.mubr.bf16.gmra.mrb[0].mxu0 %v764
    %v855 = vpop.f32.mrb[0].mxu0
    %v856 = vadd.f32 0.0, %v855
    %v857 = vpop.f32.mrb[0].mxu0
    %v858 = vpop.f32.mrb[0].mxu0
    %v859 = vadd.f32 0.0, %v858
    %v860 = vpop.f32.mrb[0].mxu0
    %861 = vdwg.mxu0
    %v862 = vsel %vm442, %v294, inf
    %v863 = vsel %vm443, %v295, inf
    %v864 = vsel %vm444, %v296, inf
    %v865 = vsel %vm445, %v297, inf
    %v866 = vsel %vm446, %v298, inf
    %v867 = vsel %vm447, %v299, inf
    %v868 = vsel %vm448, %v300, inf
    %v869 = vsel %vm449, %v301, inf
    %v870 = vsel %vm450, %v302, inf
    %v871 = vsel %vm451, %v303, inf
    %v872 = vsel %vm452, %v304, inf
    %v873 = vsel %vm453, %v305, inf
    %v874 = vsel %vm454, %v306, inf
    %v875 = vsel %vm455, %v307, inf
    %v876 = vsel %vm456, %v308, inf
    %v877 = vsel %vm457, %v309, inf
    %vm878 = vcmp.lt.f32.partialorder %v800, 56.0
    %vm879 = vcmp.lt.f32.partialorder %v803, 56.0
    %vm880 = vcmp.lt.f32.partialorder %v808, 56.0
    %vm881 = vcmp.lt.f32.partialorder %v811, 56.0
    %vm882 = vcmp.lt.f32.partialorder %v816, 56.0
    %vm883 = vcmp.lt.f32.partialorder %v819, 56.0
    %vm884 = vcmp.lt.f32.partialorder %v824, 56.0
    %vm885 = vcmp.lt.f32.partialorder %v827, 56.0
    %vm886 = vcmp.lt.f32.partialorder %v832, 56.0
    %vm887 = vcmp.lt.f32.partialorder %v835, 56.0
    %vm888 = vcmp.lt.f32.partialorder %v840, 56.0
    %vm889 = vcmp.lt.f32.partialorder %v843, 56.0
    %vm890 = vcmp.lt.f32.partialorder %v848, 56.0
    %vm891 = vcmp.lt.f32.partialorder %v851, 56.0
    %vm892 = vcmp.lt.f32.partialorder %v856, 56.0
    %vm893 = vcmp.lt.f32.partialorder %v859, 56.0
    %v894 = vsel %vm878, %v862, inf
    %v895 = vsel %vm879, %v863, inf
    %v896 = vsel %vm880, %v864, inf
    %v897 = vsel %vm881, %v865, inf
    %v898 = vsel %vm882, %v866, inf
    %v899 = vsel %vm883, %v867, inf
    %v900 = vsel %vm884, %v868, inf
    %v901 = vsel %vm885, %v869, inf
    %v902 = vsel %vm886, %v870, inf
    %v903 = vsel %vm887, %v871, inf
    %v904 = vsel %vm888, %v872, inf
    %v905 = vsel %vm889, %v873, inf
    %v906 = vsel %vm890, %v874, inf
    %v907 = vsel %vm891, %v875, inf
    %v908 = vsel %vm892, %v876, inf
    %v909 = vsel %vm893, %v877, inf
    %910 = vmin.xlane.f32.xlu0 %v894
    %v911 = vpop.xlane.xlu0 %910
    %912 = vmin.xlane.f32.xlu0 %v895
    %v913 = vpop.xlane.xlu0 %912
    %914 = vmin.xlane.f32.xlu0 %v896
    %v915 = vpop.xlane.xlu0 %914
    %916 = vmin.xlane.f32.xlu0 %v897
    %v917 = vpop.xlane.xlu0 %916
    %918 = vmin.xlane.f32.xlu0 %v898
    %v919 = vpop.xlane.xlu0 %918
    %920 = vmin.xlane.f32.xlu0 %v899
    %v921 = vpop.xlane.xlu0 %920
    %922 = vmin.xlane.f32.xlu0 %v900
    %v923 = vpop.xlane.xlu0 %922
    %924 = vmin.xlane.f32.xlu0 %v901
    %v925 = vpop.xlane.xlu0 %924
    %926 = vmin.xlane.f32.xlu0 %v902
    %v927 = vpop.xlane.xlu0 %926
    %928 = vmin.xlane.f32.xlu0 %v903
    %v929 = vpop.xlane.xlu0 %928
    %930 = vmin.xlane.f32.xlu0 %v904
    %v931 = vpop.xlane.xlu0 %930
    %932 = vmin.xlane.f32.xlu0 %v905
    %v933 = vpop.xlane.xlu0 %932
    %934 = vmin.xlane.f32.xlu0 %v906
    %v935 = vpop.xlane.xlu0 %934
    %936 = vmin.xlane.f32.xlu0 %v907
    %v937 = vpop.xlane.xlu0 %936
    %938 = vmin.xlane.f32.xlu0 %v908
    %v939 = vpop.xlane.xlu0 %938
    %940 = vmin.xlane.f32.xlu0 %v909
    %v941 = vpop.xlane.xlu0 %940
    %vm942 = vcmp.le.f32.partialorder %v894, %v911
    %vm943 = vcmp.le.f32.partialorder %v895, %v913
    %vm944 = vcmp.le.f32.partialorder %v896, %v915
    %vm945 = vcmp.le.f32.partialorder %v897, %v917
    %vm946 = vcmp.le.f32.partialorder %v898, %v919
    %vm947 = vcmp.le.f32.partialorder %v899, %v921
    %vm948 = vcmp.le.f32.partialorder %v900, %v923
    %vm949 = vcmp.le.f32.partialorder %v901, %v925
    %vm950 = vcmp.le.f32.partialorder %v902, %v927
    %vm951 = vcmp.le.f32.partialorder %v903, %v929
    %vm952 = vcmp.le.f32.partialorder %v904, %v931
    %vm953 = vcmp.le.f32.partialorder %v905, %v933
    %vm954 = vcmp.le.f32.partialorder %v906, %v935
    %vm955 = vcmp.le.f32.partialorder %v907, %v937
    %vm956 = vcmp.le.f32.partialorder %v908, %v939
    %vm957 = vcmp.le.f32.partialorder %v909, %v941
    %v958 = vsel %vm942, %v668, 128
    %v959 = vsel %vm943, %v668, 128
    %v960 = vsel %vm944, %v668, 128
    %v961 = vsel %vm945, %v668, 128
    %v962 = vsel %vm946, %v668, 128
    %v963 = vsel %vm947, %v668, 128
    %v964 = vsel %vm948, %v668, 128
    %v965 = vsel %vm949, %v668, 128
    %v966 = vsel %vm950, %v668, 128
    %v967 = vsel %vm951, %v668, 128
    %v968 = vsel %vm952, %v668, 128
    %v969 = vsel %vm953, %v668, 128
    %v970 = vsel %vm954, %v668, 128
    %v971 = vsel %vm955, %v668, 128
    %v972 = vsel %vm956, %v668, 128
    %v973 = vsel %vm957, %v668, 128
    %v974 = vand.u32 %v958, 65535
    %v975 = vshra.s32 %v958, 16
    %v976 = vcvt.s32.f32 %v974
    %v977 = vcvt.s32.f32 %v975
    %978 = vmin.xlane.f32.xlu0 %v977
    %v979 = vpop.xlane.xlu0 %978
    %vm980 = vcmp.eq.f32.partialorder %v977, %v979
    %v981 = vsel %vm980, %v976, inf
    %982 = vmin.xlane.f32.xlu0 %v981
    %v983 = vpop.xlane.xlu0 %982
    %v984 = vcvt.f32.s32 %v983
    %v985 = vcvt.f32.s32 %v979
    %v986 = vshll.u32 %v985, 16
    %v987 = vadd.s32 %v986, %v984
    %v988 = vand.u32 %v959, 65535
    %v989 = vshra.s32 %v959, 16
    %v990 = vcvt.s32.f32 %v988
    %v991 = vcvt.s32.f32 %v989
    %992 = vmin.xlane.f32.xlu0 %v991
    %v993 = vpop.xlane.xlu0 %992
    %vm994 = vcmp.eq.f32.partialorder %v991, %v993
    %v995 = vsel %vm994, %v990, inf
    %996 = vmin.xlane.f32.xlu0 %v995
    %v997 = vpop.xlane.xlu0 %996
    %v998 = vcvt.f32.s32 %v997
    %v999 = vcvt.f32.s32 %v993
    %v1000 = vshll.u32 %v999, 16
    %v1001 = vadd.s32 %v1000, %v998
    %v1002 = vand.u32 %v960, 65535
    %v1003 = vshra.s32 %v960, 16
    %v1004 = vcvt.s32.f32 %v1002
    %v1005 = vcvt.s32.f32 %v1003
    %1006 = vmin.xlane.f32.xlu0 %v1005
    %v1007 = vpop.xlane.xlu0 %1006
    %vm1008 = vcmp.eq.f32.partialorder %v1005, %v1007
    %v1009 = vsel %vm1008, %v1004, inf
    %1010 = vmin.xlane.f32.xlu0 %v1009
    %v1011 = vpop.xlane.xlu0 %1010
    %v1012 = vcvt.f32.s32 %v1011
    %v1013 = vcvt.f32.s32 %v1007
    %v1014 = vshll.u32 %v1013, 16
    %v1015 = vadd.s32 %v1014, %v1012
    %v1016 = vand.u32 %v961, 65535
    %v1017 = vshra.s32 %v961, 16
    %v1018 = vcvt.s32.f32 %v1016
    %v1019 = vcvt.s32.f32 %v1017
    %1020 = vmin.xlane.f32.xlu0 %v1019
    %v1021 = vpop.xlane.xlu0 %1020
    %vm1022 = vcmp.eq.f32.partialorder %v1019, %v1021
    %v1023 = vsel %vm1022, %v1018, inf
    %1024 = vmin.xlane.f32.xlu0 %v1023
    %v1025 = vpop.xlane.xlu0 %1024
    %v1026 = vcvt.f32.s32 %v1025
    %v1027 = vcvt.f32.s32 %v1021
    %v1028 = vshll.u32 %v1027, 16
    %v1029 = vadd.s32 %v1028, %v1026
    %v1030 = vand.u32 %v962, 65535
    %v1031 = vshra.s32 %v962, 16
    %v1032 = vcvt.s32.f32 %v1030
    %v1033 = vcvt.s32.f32 %v1031
    %1034 = vmin.xlane.f32.xlu0 %v1033
    %v1035 = vpop.xlane.xlu0 %1034
    %vm1036 = vcmp.eq.f32.partialorder %v1033, %v1035
    %v1037 = vsel %vm1036, %v1032, inf
    %1038 = vmin.xlane.f32.xlu0 %v1037
    %v1039 = vpop.xlane.xlu0 %1038
    %v1040 = vcvt.f32.s32 %v1039
    %v1041 = vcvt.f32.s32 %v1035
    %v1042 = vshll.u32 %v1041, 16
    %v1043 = vadd.s32 %v1042, %v1040
    %v1044 = vand.u32 %v963, 65535
    %v1045 = vshra.s32 %v963, 16
    %v1046 = vcvt.s32.f32 %v1044
    %v1047 = vcvt.s32.f32 %v1045
    %1048 = vmin.xlane.f32.xlu0 %v1047
    %v1049 = vpop.xlane.xlu0 %1048
    %vm1050 = vcmp.eq.f32.partialorder %v1047, %v1049
    %v1051 = vsel %vm1050, %v1046, inf
    %1052 = vmin.xlane.f32.xlu0 %v1051
    %v1053 = vpop.xlane.xlu0 %1052
    %v1054 = vcvt.f32.s32 %v1053
    %v1055 = vcvt.f32.s32 %v1049
    %v1056 = vshll.u32 %v1055, 16
    %v1057 = vadd.s32 %v1056, %v1054
    %v1058 = vand.u32 %v964, 65535
    %v1059 = vshra.s32 %v964, 16
    %v1060 = vcvt.s32.f32 %v1058
    %v1061 = vcvt.s32.f32 %v1059
    %1062 = vmin.xlane.f32.xlu0 %v1061
    %v1063 = vpop.xlane.xlu0 %1062
    %vm1064 = vcmp.eq.f32.partialorder %v1061, %v1063
    %v1065 = vsel %vm1064, %v1060, inf
    %1066 = vmin.xlane.f32.xlu0 %v1065
    %v1067 = vpop.xlane.xlu0 %1066
    %v1068 = vcvt.f32.s32 %v1067
    %v1069 = vcvt.f32.s32 %v1063
    %v1070 = vshll.u32 %v1069, 16
    %v1071 = vadd.s32 %v1070, %v1068
    %v1072 = vand.u32 %v965, 65535
    %v1073 = vshra.s32 %v965, 16
    %v1074 = vcvt.s32.f32 %v1072
    %v1075 = vcvt.s32.f32 %v1073
    %1076 = vmin.xlane.f32.xlu0 %v1075
    %v1077 = vpop.xlane.xlu0 %1076
    %vm1078 = vcmp.eq.f32.partialorder %v1075, %v1077
    %v1079 = vsel %vm1078, %v1074, inf
    %1080 = vmin.xlane.f32.xlu0 %v1079
    %v1081 = vpop.xlane.xlu0 %1080
    %v1082 = vcvt.f32.s32 %v1081
    %v1083 = vcvt.f32.s32 %v1077
    %v1084 = vshll.u32 %v1083, 16
    %v1085 = vadd.s32 %v1084, %v1082
    %v1086 = vand.u32 %v966, 65535
    %v1087 = vshra.s32 %v966, 16
    %v1088 = vcvt.s32.f32 %v1086
    %v1089 = vcvt.s32.f32 %v1087
    %1090 = vmin.xlane.f32.xlu0 %v1089
    %v1091 = vpop.xlane.xlu0 %1090
    %vm1092 = vcmp.eq.f32.partialorder %v1089, %v1091
    %v1093 = vsel %vm1092, %v1088, inf
    %1094 = vmin.xlane.f32.xlu0 %v1093
    %v1095 = vpop.xlane.xlu0 %1094
    %v1096 = vcvt.f32.s32 %v1095
    %v1097 = vcvt.f32.s32 %v1091
    %v1098 = vshll.u32 %v1097, 16
    %v1099 = vadd.s32 %v1098, %v1096
    %v1100 = vand.u32 %v967, 65535
    %v1101 = vshra.s32 %v967, 16
    %v1102 = vcvt.s32.f32 %v1100
    %v1103 = vcvt.s32.f32 %v1101
    %1104 = vmin.xlane.f32.xlu0 %v1103
    %v1105 = vpop.xlane.xlu0 %1104
    %vm1106 = vcmp.eq.f32.partialorder %v1103, %v1105
    %v1107 = vsel %vm1106, %v1102, inf
    %1108 = vmin.xlane.f32.xlu0 %v1107
    %v1109 = vpop.xlane.xlu0 %1108
    %v1110 = vcvt.f32.s32 %v1109
    %v1111 = vcvt.f32.s32 %v1105
    %v1112 = vshll.u32 %v1111, 16
    %v1113 = vadd.s32 %v1112, %v1110
    %v1114 = vand.u32 %v968, 65535
    %v1115 = vshra.s32 %v968, 16
    %v1116 = vcvt.s32.f32 %v1114
    %v1117 = vcvt.s32.f32 %v1115
    %1118 = vmin.xlane.f32.xlu0 %v1117
    %v1119 = vpop.xlane.xlu0 %1118
    %vm1120 = vcmp.eq.f32.partialorder %v1117, %v1119
    %v1121 = vsel %vm1120, %v1116, inf
    %1122 = vmin.xlane.f32.xlu0 %v1121
    %v1123 = vpop.xlane.xlu0 %1122
    %v1124 = vcvt.f32.s32 %v1123
    %v1125 = vcvt.f32.s32 %v1119
    %v1126 = vshll.u32 %v1125, 16
    %v1127 = vadd.s32 %v1126, %v1124
    %v1128 = vand.u32 %v969, 65535
    %v1129 = vshra.s32 %v969, 16
    %v1130 = vcvt.s32.f32 %v1128
    %v1131 = vcvt.s32.f32 %v1129
    %1132 = vmin.xlane.f32.xlu0 %v1131
    %v1133 = vpop.xlane.xlu0 %1132
    %vm1134 = vcmp.eq.f32.partialorder %v1131, %v1133
    %v1135 = vsel %vm1134, %v1130, inf
    %1136 = vmin.xlane.f32.xlu0 %v1135
    %v1137 = vpop.xlane.xlu0 %1136
    %v1138 = vcvt.f32.s32 %v1137
    %v1139 = vcvt.f32.s32 %v1133
    %v1140 = vshll.u32 %v1139, 16
    %v1141 = vadd.s32 %v1140, %v1138
    %v1142 = vand.u32 %v970, 65535
    %v1143 = vshra.s32 %v970, 16
    %v1144 = vcvt.s32.f32 %v1142
    %v1145 = vcvt.s32.f32 %v1143
    %1146 = vmin.xlane.f32.xlu0 %v1145
    %v1147 = vpop.xlane.xlu0 %1146
    %vm1148 = vcmp.eq.f32.partialorder %v1145, %v1147
    %v1149 = vsel %vm1148, %v1144, inf
    %1150 = vmin.xlane.f32.xlu0 %v1149
    %v1151 = vpop.xlane.xlu0 %1150
    %v1152 = vcvt.f32.s32 %v1151
    %v1153 = vcvt.f32.s32 %v1147
    %v1154 = vshll.u32 %v1153, 16
    %v1155 = vadd.s32 %v1154, %v1152
    %v1156 = vand.u32 %v971, 65535
    %v1157 = vshra.s32 %v971, 16
    %v1158 = vcvt.s32.f32 %v1156
    %v1159 = vcvt.s32.f32 %v1157
    %1160 = vmin.xlane.f32.xlu0 %v1159
    %v1161 = vpop.xlane.xlu0 %1160
    %vm1162 = vcmp.eq.f32.partialorder %v1159, %v1161
    %v1163 = vsel %vm1162, %v1158, inf
    %1164 = vmin.xlane.f32.xlu0 %v1163
    %v1165 = vpop.xlane.xlu0 %1164
    %v1166 = vcvt.f32.s32 %v1165
    %v1167 = vcvt.f32.s32 %v1161
    %v1168 = vshll.u32 %v1167, 16
    %v1169 = vadd.s32 %v1168, %v1166
    %v1170 = vand.u32 %v972, 65535
    %v1171 = vshra.s32 %v972, 16
    %v1172 = vcvt.s32.f32 %v1170
    %v1173 = vcvt.s32.f32 %v1171
    %1174 = vmin.xlane.f32.xlu0 %v1173
    %v1175 = vpop.xlane.xlu0 %1174
    %vm1176 = vcmp.eq.f32.partialorder %v1173, %v1175
    %v1177 = vsel %vm1176, %v1172, inf
    %1178 = vmin.xlane.f32.xlu0 %v1177
    %v1179 = vpop.xlane.xlu0 %1178
    %v1180 = vcvt.f32.s32 %v1179
    %v1181 = vcvt.f32.s32 %v1175
    %v1182 = vshll.u32 %v1181, 16
    %v1183 = vadd.s32 %v1182, %v1180
    %v1184 = vand.u32 %v973, 65535
    %v1185 = vshra.s32 %v973, 16
    %v1186 = vcvt.s32.f32 %v1184
    %v1187 = vcvt.s32.f32 %v1185
    %1188 = vmin.xlane.f32.xlu0 %v1187
    %v1189 = vpop.xlane.xlu0 %1188
    %vm1190 = vcmp.eq.f32.partialorder %v1187, %v1189
    %v1191 = vsel %vm1190, %v1186, inf
    %1192 = vmin.xlane.f32.xlu0 %v1191
    %v1193 = vpop.xlane.xlu0 %1192
    %v1194 = vcvt.f32.s32 %v1193
    %v1195 = vcvt.f32.s32 %v1189
    %v1196 = vshll.u32 %v1195, 16
    %v1197 = vadd.s32 %v1196, %v1194
    %vm1198 = vcmp.eq.s32.totalorder %v668, %v987
    %vm1199 = vcmp.eq.s32.totalorder %v668, %v1001
    %vm1200 = vcmp.eq.s32.totalorder %v668, %v1015
    %vm1201 = vcmp.eq.s32.totalorder %v668, %v1029
    %vm1202 = vcmp.eq.s32.totalorder %v668, %v1043
    %vm1203 = vcmp.eq.s32.totalorder %v668, %v1057
    %vm1204 = vcmp.eq.s32.totalorder %v668, %v1071
    %vm1205 = vcmp.eq.s32.totalorder %v668, %v1085
    %vm1206 = vcmp.eq.s32.totalorder %v668, %v1099
    %vm1207 = vcmp.eq.s32.totalorder %v668, %v1113
    %vm1208 = vcmp.eq.s32.totalorder %v668, %v1127
    %vm1209 = vcmp.eq.s32.totalorder %v668, %v1141
    %vm1210 = vcmp.eq.s32.totalorder %v668, %v1155
    %vm1211 = vcmp.eq.s32.totalorder %v668, %v1169
    %vm1212 = vcmp.eq.s32.totalorder %v668, %v1183
    %vm1213 = vcmp.eq.s32.totalorder %v668, %v1197
    %vm1214 = vcmp.ge.f32.partialorder %v800, 56.0
    %vm1215 = vcmp.ge.f32.partialorder %v803, 56.0
    %vm1216 = vcmp.ge.f32.partialorder %v808, 56.0
    %vm1217 = vcmp.ge.f32.partialorder %v811, 56.0
    %vm1218 = vcmp.ge.f32.partialorder %v816, 56.0
    %vm1219 = vcmp.ge.f32.partialorder %v819, 56.0
    %vm1220 = vcmp.ge.f32.partialorder %v824, 56.0
    %vm1221 = vcmp.ge.f32.partialorder %v827, 56.0
    %vm1222 = vcmp.ge.f32.partialorder %v832, 56.0
    %vm1223 = vcmp.ge.f32.partialorder %v835, 56.0
    %vm1224 = vcmp.ge.f32.partialorder %v840, 56.0
    %vm1225 = vcmp.ge.f32.partialorder %v843, 56.0
    %vm1226 = vcmp.ge.f32.partialorder %v848, 56.0
    %vm1227 = vcmp.ge.f32.partialorder %v851, 56.0
    %vm1228 = vcmp.ge.f32.partialorder %v856, 56.0
    %vm1229 = vcmp.ge.f32.partialorder %v859, 56.0
    %v1230 = vsel %vm1214, %v862, inf
    %v1231 = vsel %vm1215, %v863, inf
    %v1232 = vsel %vm1216, %v864, inf
    %v1233 = vsel %vm1217, %v865, inf
    %v1234 = vsel %vm1218, %v866, inf
    %v1235 = vsel %vm1219, %v867, inf
    %v1236 = vsel %vm1220, %v868, inf
    %v1237 = vsel %vm1221, %v869, inf
    %v1238 = vsel %vm1222, %v870, inf
    %v1239 = vsel %vm1223, %v871, inf
    %v1240 = vsel %vm1224, %v872, inf
    %v1241 = vsel %vm1225, %v873, inf
    %v1242 = vsel %vm1226, %v874, inf
    %v1243 = vsel %vm1227, %v875, inf
    %v1244 = vsel %vm1228, %v876, inf
    %v1245 = vsel %vm1229, %v877, inf
    %1246 = vmin.xlane.f32.xlu0 %v1230
    %v1247 = vpop.xlane.xlu0 %1246
    %1248 = vmin.xlane.f32.xlu0 %v1231
    %v1249 = vpop.xlane.xlu0 %1248
    %1250 = vmin.xlane.f32.xlu0 %v1232
    %v1251 = vpop.xlane.xlu0 %1250
    %1252 = vmin.xlane.f32.xlu0 %v1233
    %v1253 = vpop.xlane.xlu0 %1252
    %1254 = vmin.xlane.f32.xlu0 %v1234
    %v1255 = vpop.xlane.xlu0 %1254
    %1256 = vmin.xlane.f32.xlu0 %v1235
    %v1257 = vpop.xlane.xlu0 %1256
    %1258 = vmin.xlane.f32.xlu0 %v1236
    %v1259 = vpop.xlane.xlu0 %1258
    %1260 = vmin.xlane.f32.xlu0 %v1237
    %v1261 = vpop.xlane.xlu0 %1260
    %1262 = vmin.xlane.f32.xlu0 %v1238
    %v1263 = vpop.xlane.xlu0 %1262
    %1264 = vmin.xlane.f32.xlu0 %v1239
    %v1265 = vpop.xlane.xlu0 %1264
    %1266 = vmin.xlane.f32.xlu0 %v1240
    %v1267 = vpop.xlane.xlu0 %1266
    %1268 = vmin.xlane.f32.xlu0 %v1241
    %v1269 = vpop.xlane.xlu0 %1268
    %1270 = vmin.xlane.f32.xlu0 %v1242
    %v1271 = vpop.xlane.xlu0 %1270
    %1272 = vmin.xlane.f32.xlu0 %v1243
    %v1273 = vpop.xlane.xlu0 %1272
    %1274 = vmin.xlane.f32.xlu0 %v1244
    %v1275 = vpop.xlane.xlu0 %1274
    %1276 = vmin.xlane.f32.xlu0 %v1245
    %v1277 = vpop.xlane.xlu0 %1276
    %vm1278 = vcmp.le.f32.partialorder %v1230, %v1247
    %vm1279 = vcmp.le.f32.partialorder %v1231, %v1249
    %vm1280 = vcmp.le.f32.partialorder %v1232, %v1251
    %vm1281 = vcmp.le.f32.partialorder %v1233, %v1253
    %vm1282 = vcmp.le.f32.partialorder %v1234, %v1255
    %vm1283 = vcmp.le.f32.partialorder %v1235, %v1257
    %vm1284 = vcmp.le.f32.partialorder %v1236, %v1259
    %vm1285 = vcmp.le.f32.partialorder %v1237, %v1261
    %vm1286 = vcmp.le.f32.partialorder %v1238, %v1263
    %vm1287 = vcmp.le.f32.partialorder %v1239, %v1265
    %vm1288 = vcmp.le.f32.partialorder %v1240, %v1267
    %vm1289 = vcmp.le.f32.partialorder %v1241, %v1269
    %vm1290 = vcmp.le.f32.partialorder %v1242, %v1271
    %vm1291 = vcmp.le.f32.partialorder %v1243, %v1273
    %vm1292 = vcmp.le.f32.partialorder %v1244, %v1275
    %vm1293 = vcmp.le.f32.partialorder %v1245, %v1277
    %v1294 = vsel %vm1278, %v668, 128
    %v1295 = vsel %vm1279, %v668, 128
    %v1296 = vsel %vm1280, %v668, 128
    %v1297 = vsel %vm1281, %v668, 128
    %v1298 = vsel %vm1282, %v668, 128
    %v1299 = vsel %vm1283, %v668, 128
    %v1300 = vsel %vm1284, %v668, 128
    %v1301 = vsel %vm1285, %v668, 128
    %v1302 = vsel %vm1286, %v668, 128
    %v1303 = vsel %vm1287, %v668, 128
    %v1304 = vsel %vm1288, %v668, 128
    %v1305 = vsel %vm1289, %v668, 128
    %v1306 = vsel %vm1290, %v668, 128
    %v1307 = vsel %vm1291, %v668, 128
    %v1308 = vsel %vm1292, %v668, 128
    %v1309 = vsel %vm1293, %v668, 128
    %v1310 = vand.u32 %v1294, 65535
    %v1311 = vshra.s32 %v1294, 16
    %v1312 = vcvt.s32.f32 %v1310
    %v1313 = vcvt.s32.f32 %v1311
    %1314 = vmin.xlane.f32.xlu0 %v1313
    %v1315 = vpop.xlane.xlu0 %1314
    %vm1316 = vcmp.eq.f32.partialorder %v1313, %v1315
    %v1317 = vsel %vm1316, %v1312, inf
    %1318 = vmin.xlane.f32.xlu0 %v1317
    %v1319 = vpop.xlane.xlu0 %1318
    %v1320 = vcvt.f32.s32 %v1319
    %v1321 = vcvt.f32.s32 %v1315
    %v1322 = vshll.u32 %v1321, 16
    %v1323 = vadd.s32 %v1322, %v1320
    %v1324 = vand.u32 %v1295, 65535
    %v1325 = vshra.s32 %v1295, 16
    %v1326 = vcvt.s32.f32 %v1324
    %v1327 = vcvt.s32.f32 %v1325
    %1328 = vmin.xlane.f32.xlu0 %v1327
    %v1329 = vpop.xlane.xlu0 %1328
    %vm1330 = vcmp.eq.f32.partialorder %v1327, %v1329
    %v1331 = vsel %vm1330, %v1326, inf
    %1332 = vmin.xlane.f32.xlu0 %v1331
    %v1333 = vpop.xlane.xlu0 %1332
    %v1334 = vcvt.f32.s32 %v1333
    %v1335 = vcvt.f32.s32 %v1329
    %v1336 = vshll.u32 %v1335, 16
    %v1337 = vadd.s32 %v1336, %v1334
    %v1338 = vand.u32 %v1296, 65535
    %v1339 = vshra.s32 %v1296, 16
    %v1340 = vcvt.s32.f32 %v1338
    %v1341 = vcvt.s32.f32 %v1339
    %1342 = vmin.xlane.f32.xlu0 %v1341
    %v1343 = vpop.xlane.xlu0 %1342
    %vm1344 = vcmp.eq.f32.partialorder %v1341, %v1343
    %v1345 = vsel %vm1344, %v1340, inf
    %1346 = vmin.xlane.f32.xlu0 %v1345
    %v1347 = vpop.xlane.xlu0 %1346
    %v1348 = vcvt.f32.s32 %v1347
    %v1349 = vcvt.f32.s32 %v1343
    %v1350 = vshll.u32 %v1349, 16
    %v1351 = vadd.s32 %v1350, %v1348
    %v1352 = vand.u32 %v1297, 65535
    %v1353 = vshra.s32 %v1297, 16
    %v1354 = vcvt.s32.f32 %v1352
    %v1355 = vcvt.s32.f32 %v1353
    %1356 = vmin.xlane.f32.xlu0 %v1355
    %v1357 = vpop.xlane.xlu0 %1356
    %vm1358 = vcmp.eq.f32.partialorder %v1355, %v1357
    %v1359 = vsel %vm1358, %v1354, inf
    %1360 = vmin.xlane.f32.xlu0 %v1359
    %v1361 = vpop.xlane.xlu0 %1360
    %v1362 = vcvt.f32.s32 %v1361
    %v1363 = vcvt.f32.s32 %v1357
    %v1364 = vshll.u32 %v1363, 16
    %v1365 = vadd.s32 %v1364, %v1362
    %v1366 = vand.u32 %v1298, 65535
    %v1367 = vshra.s32 %v1298, 16
    %v1368 = vcvt.s32.f32 %v1366
    %v1369 = vcvt.s32.f32 %v1367
    %1370 = vmin.xlane.f32.xlu0 %v1369
    %v1371 = vpop.xlane.xlu0 %1370
    %vm1372 = vcmp.eq.f32.partialorder %v1369, %v1371
    %v1373 = vsel %vm1372, %v1368, inf
    %1374 = vmin.xlane.f32.xlu0 %v1373
    %v1375 = vpop.xlane.xlu0 %1374
    %v1376 = vcvt.f32.s32 %v1375
    %v1377 = vcvt.f32.s32 %v1371
    %v1378 = vshll.u32 %v1377, 16
    %v1379 = vadd.s32 %v1378, %v1376
    %v1380 = vand.u32 %v1299, 65535
    %v1381 = vshra.s32 %v1299, 16
    %v1382 = vcvt.s32.f32 %v1380
    %v1383 = vcvt.s32.f32 %v1381
    %1384 = vmin.xlane.f32.xlu0 %v1383
    %v1385 = vpop.xlane.xlu0 %1384
    %vm1386 = vcmp.eq.f32.partialorder %v1383, %v1385
    %v1387 = vsel %vm1386, %v1382, inf
    %1388 = vmin.xlane.f32.xlu0 %v1387
    %v1389 = vpop.xlane.xlu0 %1388
    %v1390 = vcvt.f32.s32 %v1389
    %v1391 = vcvt.f32.s32 %v1385
    %v1392 = vshll.u32 %v1391, 16
    %v1393 = vadd.s32 %v1392, %v1390
    %v1394 = vand.u32 %v1300, 65535
    %v1395 = vshra.s32 %v1300, 16
    %v1396 = vcvt.s32.f32 %v1394
    %v1397 = vcvt.s32.f32 %v1395
    %1398 = vmin.xlane.f32.xlu0 %v1397
    %v1399 = vpop.xlane.xlu0 %1398
    %vm1400 = vcmp.eq.f32.partialorder %v1397, %v1399
    %v1401 = vsel %vm1400, %v1396, inf
    %1402 = vmin.xlane.f32.xlu0 %v1401
    %v1403 = vpop.xlane.xlu0 %1402
    %v1404 = vcvt.f32.s32 %v1403
    %v1405 = vcvt.f32.s32 %v1399
    %v1406 = vshll.u32 %v1405, 16
    %v1407 = vadd.s32 %v1406, %v1404
    %v1408 = vand.u32 %v1301, 65535
    %v1409 = vshra.s32 %v1301, 16
    %v1410 = vcvt.s32.f32 %v1408
    %v1411 = vcvt.s32.f32 %v1409
    %1412 = vmin.xlane.f32.xlu0 %v1411
    %v1413 = vpop.xlane.xlu0 %1412
    %vm1414 = vcmp.eq.f32.partialorder %v1411, %v1413
    %v1415 = vsel %vm1414, %v1410, inf
    %1416 = vmin.xlane.f32.xlu0 %v1415
    %v1417 = vpop.xlane.xlu0 %1416
    %v1418 = vcvt.f32.s32 %v1417
    %v1419 = vcvt.f32.s32 %v1413
    %v1420 = vshll.u32 %v1419, 16
    %v1421 = vadd.s32 %v1420, %v1418
    %v1422 = vand.u32 %v1302, 65535
    %v1423 = vshra.s32 %v1302, 16
    %v1424 = vcvt.s32.f32 %v1422
    %v1425 = vcvt.s32.f32 %v1423
    %1426 = vmin.xlane.f32.xlu0 %v1425
    %v1427 = vpop.xlane.xlu0 %1426
    %vm1428 = vcmp.eq.f32.partialorder %v1425, %v1427
    %v1429 = vsel %vm1428, %v1424, inf
    %1430 = vmin.xlane.f32.xlu0 %v1429
    %v1431 = vpop.xlane.xlu0 %1430
    %v1432 = vcvt.f32.s32 %v1431
    %v1433 = vcvt.f32.s32 %v1427
    %v1434 = vshll.u32 %v1433, 16
    %v1435 = vadd.s32 %v1434, %v1432
    %v1436 = vand.u32 %v1303, 65535
    %v1437 = vshra.s32 %v1303, 16
    %v1438 = vcvt.s32.f32 %v1436
    %v1439 = vcvt.s32.f32 %v1437
    %1440 = vmin.xlane.f32.xlu0 %v1439
    %v1441 = vpop.xlane.xlu0 %1440
    %vm1442 = vcmp.eq.f32.partialorder %v1439, %v1441
    %v1443 = vsel %vm1442, %v1438, inf
    %1444 = vmin.xlane.f32.xlu0 %v1443
    %v1445 = vpop.xlane.xlu0 %1444
    %v1446 = vcvt.f32.s32 %v1445
    %v1447 = vcvt.f32.s32 %v1441
    %v1448 = vshll.u32 %v1447, 16
    %v1449 = vadd.s32 %v1448, %v1446
    %v1450 = vand.u32 %v1304, 65535
    %v1451 = vshra.s32 %v1304, 16
    %v1452 = vcvt.s32.f32 %v1450
    %v1453 = vcvt.s32.f32 %v1451
    %1454 = vmin.xlane.f32.xlu0 %v1453
    %v1455 = vpop.xlane.xlu0 %1454
    %vm1456 = vcmp.eq.f32.partialorder %v1453, %v1455
    %v1457 = vsel %vm1456, %v1452, inf
    %1458 = vmin.xlane.f32.xlu0 %v1457
    %v1459 = vpop.xlane.xlu0 %1458
    %v1460 = vcvt.f32.s32 %v1459
    %v1461 = vcvt.f32.s32 %v1455
    %v1462 = vshll.u32 %v1461, 16
    %v1463 = vadd.s32 %v1462, %v1460
    %v1464 = vand.u32 %v1305, 65535
    %v1465 = vshra.s32 %v1305, 16
    %v1466 = vcvt.s32.f32 %v1464
    %v1467 = vcvt.s32.f32 %v1465
    %1468 = vmin.xlane.f32.xlu0 %v1467
    %v1469 = vpop.xlane.xlu0 %1468
    %vm1470 = vcmp.eq.f32.partialorder %v1467, %v1469
    %v1471 = vsel %vm1470, %v1466, inf
    %1472 = vmin.xlane.f32.xlu0 %v1471
    %v1473 = vpop.xlane.xlu0 %1472
    %v1474 = vcvt.f32.s32 %v1473
    %v1475 = vcvt.f32.s32 %v1469
    %v1476 = vshll.u32 %v1475, 16
    %v1477 = vadd.s32 %v1476, %v1474
    %v1478 = vand.u32 %v1306, 65535
    %v1479 = vshra.s32 %v1306, 16
    %v1480 = vcvt.s32.f32 %v1478
    %v1481 = vcvt.s32.f32 %v1479
    %1482 = vmin.xlane.f32.xlu0 %v1481
    %v1483 = vpop.xlane.xlu0 %1482
    %vm1484 = vcmp.eq.f32.partialorder %v1481, %v1483
    %v1485 = vsel %vm1484, %v1480, inf
    %1486 = vmin.xlane.f32.xlu0 %v1485
    %v1487 = vpop.xlane.xlu0 %1486
    %v1488 = vcvt.f32.s32 %v1487
    %v1489 = vcvt.f32.s32 %v1483
    %v1490 = vshll.u32 %v1489, 16
    %v1491 = vadd.s32 %v1490, %v1488
    %v1492 = vand.u32 %v1307, 65535
    %v1493 = vshra.s32 %v1307, 16
    %v1494 = vcvt.s32.f32 %v1492
    %v1495 = vcvt.s32.f32 %v1493
    %1496 = vmin.xlane.f32.xlu0 %v1495
    %v1497 = vpop.xlane.xlu0 %1496
    %vm1498 = vcmp.eq.f32.partialorder %v1495, %v1497
    %v1499 = vsel %vm1498, %v1494, inf
    %1500 = vmin.xlane.f32.xlu0 %v1499
    %v1501 = vpop.xlane.xlu0 %1500
    %v1502 = vcvt.f32.s32 %v1501
    %v1503 = vcvt.f32.s32 %v1497
    %v1504 = vshll.u32 %v1503, 16
    %v1505 = vadd.s32 %v1504, %v1502
    %v1506 = vand.u32 %v1308, 65535
    %v1507 = vshra.s32 %v1308, 16
    %v1508 = vcvt.s32.f32 %v1506
    %v1509 = vcvt.s32.f32 %v1507
    %1510 = vmin.xlane.f32.xlu0 %v1509
    %v1511 = vpop.xlane.xlu0 %1510
    %vm1512 = vcmp.eq.f32.partialorder %v1509, %v1511
    %v1513 = vsel %vm1512, %v1508, inf
    %1514 = vmin.xlane.f32.xlu0 %v1513
    %v1515 = vpop.xlane.xlu0 %1514
    %v1516 = vcvt.f32.s32 %v1515
    %v1517 = vcvt.f32.s32 %v1511
    %v1518 = vshll.u32 %v1517, 16
    %v1519 = vadd.s32 %v1518, %v1516
    %v1520 = vand.u32 %v1309, 65535
    %v1521 = vshra.s32 %v1309, 16
    %v1522 = vcvt.s32.f32 %v1520
    %v1523 = vcvt.s32.f32 %v1521
    %1524 = vmin.xlane.f32.xlu0 %v1523
    %v1525 = vpop.xlane.xlu0 %1524
    %vm1526 = vcmp.eq.f32.partialorder %v1523, %v1525
    %v1527 = vsel %vm1526, %v1522, inf
    %1528 = vmin.xlane.f32.xlu0 %v1527
    %v1529 = vpop.xlane.xlu0 %1528
    %v1530 = vcvt.f32.s32 %v1529
    %v1531 = vcvt.f32.s32 %v1525
    %v1532 = vshll.u32 %v1531, 16
    %v1533 = vadd.s32 %v1532, %v1530
    %vm1534 = vcmp.eq.s32.totalorder %v668, %v1323
    %vm1535 = vcmp.eq.s32.totalorder %v668, %v1337
    %vm1536 = vcmp.eq.s32.totalorder %v668, %v1351
    %vm1537 = vcmp.eq.s32.totalorder %v668, %v1365
    %vm1538 = vcmp.eq.s32.totalorder %v668, %v1379
    %vm1539 = vcmp.eq.s32.totalorder %v668, %v1393
    %vm1540 = vcmp.eq.s32.totalorder %v668, %v1407
    %vm1541 = vcmp.eq.s32.totalorder %v668, %v1421
    %vm1542 = vcmp.eq.s32.totalorder %v668, %v1435
    %vm1543 = vcmp.eq.s32.totalorder %v668, %v1449
    %vm1544 = vcmp.eq.s32.totalorder %v668, %v1463
    %vm1545 = vcmp.eq.s32.totalorder %v668, %v1477
    %vm1546 = vcmp.eq.s32.totalorder %v668, %v1491
    %vm1547 = vcmp.eq.s32.totalorder %v668, %v1505
    %vm1548 = vcmp.eq.s32.totalorder %v668, %v1519
    %vm1549 = vcmp.eq.s32.totalorder %v668, %v1533
    %vm1550 = vmor %vm1198, %vm1534
    %vm1551 = vmor %vm1199, %vm1535
    %vm1552 = vmor %vm1200, %vm1536
    %vm1553 = vmor %vm1201, %vm1537
    %vm1554 = vmor %vm1202, %vm1538
    %vm1555 = vmor %vm1203, %vm1539
    %vm1556 = vmor %vm1204, %vm1540
    %vm1557 = vmor %vm1205, %vm1541
    %vm1558 = vmor %vm1206, %vm1542
    %vm1559 = vmor %vm1207, %vm1543
    %vm1560 = vmor %vm1208, %vm1544
    %vm1561 = vmor %vm1209, %vm1545
    %vm1562 = vmor %vm1210, %vm1546
    %vm1563 = vmor %vm1211, %vm1547
    %vm1564 = vmor %vm1212, %vm1548
    %vm1565 = vmor %vm1213, %vm1549
    %v1566 = vsel %vm1550, 1, 0
    %v1567 = vsel %vm1551, 1, 0
    %v1568 = vsel %vm1552, 1, 0
    %v1569 = vsel %vm1553, 1, 0
    %v1570 = vsel %vm1554, 1, 0
    %v1571 = vsel %vm1555, 1, 0
    %v1572 = vsel %vm1556, 1, 0
    %v1573 = vsel %vm1557, 1, 0
    %v1574 = vsel %vm1558, 1, 0
    %v1575 = vsel %vm1559, 1, 0
    %v1576 = vsel %vm1560, 1, 0
    %v1577 = vsel %vm1561, 1, 0
    %v1578 = vsel %vm1562, 1, 0
    %v1579 = vsel %vm1563, 1, 0
    %v1580 = vsel %vm1564, 1, 0
    %v1581 = vsel %vm1565, 1, 0
    %v1582 = vcvt.s32.f32 %v1566
    %v1583 = vcvt.s32.f32 %v1567
    %v1584 = vcvt.s32.f32 %v1568
    %v1585 = vcvt.s32.f32 %v1569
    %v1586 = vcvt.s32.f32 %v1570
    %v1587 = vcvt.s32.f32 %v1571
    %v1588 = vcvt.s32.f32 %v1572
    %v1589 = vcvt.s32.f32 %v1573
    %v1590 = vcvt.s32.f32 %v1574
    %v1591 = vcvt.s32.f32 %v1575
    %v1592 = vcvt.s32.f32 %v1576
    %v1593 = vcvt.s32.f32 %v1577
    %v1594 = vcvt.s32.f32 %v1578
    %v1595 = vcvt.s32.f32 %v1579
    %v1596 = vcvt.s32.f32 %v1580
    %v1597 = vcvt.s32.f32 %v1581
    %1598 = vmatprep.subr.mxu0 0.0
    %1599 = vmatpush1.msra.mxu0 %v22
    %1600 = vmatprep.subr.mxu0 0.0
    %1601 = vmatpush1.msra.mxu0 %v23
    %1602 = vmatprep.subr.mxu0 0.0
    %1603 = vmatpush1.msra.mxu0 %v24
    %1604 = vmatprep.subr.mxu0 0.0
    %1605 = vmatpush1.msra.mxu0 %v25
    %1606 = vmatprep.subr.mxu0 0.0
    %1607 = vmatpush1.msra.mxu0 %v26
    %1608 = vmatprep.subr.mxu0 0.0
    %1609 = vmatpush1.msra.mxu0 %v27
    %1610 = vmatprep.subr.mxu0 0.0
    %1611 = vmatpush1.msra.mxu0 %v28
    %1612 = vmatprep.subr.mxu0 0.0
    %1613 = vmatpush1.msra.mxu0 %v29
    %1614 = vmatprep.subr.mxu0 0.0
    %1615 = vmatpush1.msra.mxu0 %v30
    %1616 = vmatprep.subr.mxu0 0.0
    %1617 = vmatpush1.msra.mxu0 %v31
    %1618 = vmatprep.subr.mxu0 0.0
    %1619 = vmatpush1.msra.mxu0 %v32
    %1620 = vmatprep.subr.mxu0 0.0
    %1621 = vmatpush1.msra.mxu0 %v33
    %1622 = vmatprep.subr.mxu0 0.0
    %1623 = vmatpush1.msra.mxu0 %v34
    %1624 = vmatprep.subr.mxu0 0.0
    %1625 = vmatpush1.msra.mxu0 %v35
    %1626 = vmatprep.subr.mxu0 0.0
    %1627 = vmatpush1.msra.mxu0 %v36
    %1628 = vmatprep.subr.mxu0 0.0
    %1629 = vmatpush1.msra.mxu0 %v37
    %1630 = vmatprep.subr.mxu0 0.0
    %1631 = vmatpush1.msra.mxu0 0.0
    %1632 = vmatprep.subr.mxu0 0.0
    %1633 = vmatpush1.msra.mxu0 0.0
    %1634 = vmatprep.subr.mxu0 0.0
    %1635 = vmatpush1.msra.mxu0 0.0
    %1636 = vmatprep.subr.mxu0 0.0
    %1637 = vmatpush1.msra.mxu0 0.0
    %1638 = vmatprep.subr.mxu0 0.0
    %1639 = vmatpush1.msra.mxu0 0.0
    %1640 = vmatprep.subr.mxu0 0.0
    %1641 = vmatpush1.msra.mxu0 0.0
    %1642 = vmatprep.subr.mxu0 0.0
    %1643 = vmatpush1.msra.mxu0 0.0
    %1644 = vmatprep.subr.mxu0 0.0
    %1645 = vmatpush1.msra.mxu0 0.0
    %1646 = vmatprep.subr.mxu0 0.0
    %1647 = vmatpush1.msra.mxu0 0.0
    %1648 = vmatprep.subr.mxu0 0.0
    %1649 = vmatpush1.msra.mxu0 0.0
    %1650 = vmatprep.subr.mxu0 0.0
    %1651 = vmatpush1.msra.mxu0 0.0
    %1652 = vmatprep.subr.mxu0 0.0
    %1653 = vmatpush1.msra.mxu0 0.0
    %1654 = vmatprep.subr.mxu0 0.0
    %1655 = vmatpush1.msra.mxu0 0.0
    %1656 = vmatprep.subr.mxu0 0.0
    %1657 = vmatpush1.msra.mxu0 0.0
    %1658 = vmatprep.subr.mxu0 0.0
    %1659 = vmatpush1.msra.mxu0 0.0
    %1660 = vmatprep.subr.mxu0 0.0
    %1661 = vmatpush1.msra.mxu0 0.0
    %1662 = vmatprep.mubr.f32.mxu0 0.0
    %1663 = vmatmul.mubr.f32.gmra.mrb[0].mxu0 %v1582
    %v1664 = vpop.f32.mrb[0].mxu0
    %v1665 = vadd.f32 0.0, %v1664
    %v1666 = vpop.f32.mrb[0].mxu0
    %1667 = vmatprep.mubr.f32.mxu0 0.0
    %1668 = vmatmul.mubr.f32.gmra.mrb[0].mxu0 %v1583
    %v1669 = vpop.f32.mrb[0].mxu0
    %v1670 = vadd.f32 0.0, %v1669
    %v1671 = vpop.f32.mrb[0].mxu0
    %1672 = vmatprep.mubr.f32.mxu0 0.0
    %1673 = vmatmul.mubr.f32.gmra.mrb[0].mxu0 %v1584
    %v1674 = vpop.f32.mrb[0].mxu0
    %v1675 = vadd.f32 0.0, %v1674
    %v1676 = vpop.f32.mrb[0].mxu0
    %1677 = vmatprep.mubr.f32.mxu0 0.0
    %1678 = vmatmul.mubr.f32.gmra.mrb[0].mxu0 %v1585
    %v1679 = vpop.f32.mrb[0].mxu0
    %v1680 = vadd.f32 0.0, %v1679
    %v1681 = vpop.f32.mrb[0].mxu0
    %1682 = vmatprep.mubr.f32.mxu0 0.0
    %1683 = vmatmul.mubr.f32.gmra.mrb[0].mxu0 %v1586
    %v1684 = vpop.f32.mrb[0].mxu0
    %v1685 = vadd.f32 0.0, %v1684
    %v1686 = vpop.f32.mrb[0].mxu0
    %1687 = vmatprep.mubr.f32.mxu0 0.0
    %1688 = vmatmul.mubr.f32.gmra.mrb[0].mxu0 %v1587
    %v1689 = vpop.f32.mrb[0].mxu0
    %v1690 = vadd.f32 0.0, %v1689
    %v1691 = vpop.f32.mrb[0].mxu0
    %1692 = vmatprep.mubr.f32.mxu0 0.0
    %1693 = vmatmul.mubr.f32.gmra.mrb[0].mxu0 %v1588
    %v1694 = vpop.f32.mrb[0].mxu0
    %v1695 = vadd.f32 0.0, %v1694
    %v1696 = vpop.f32.mrb[0].mxu0
    %1697 = vmatprep.mubr.f32.mxu0 0.0
    %1698 = vmatmul.mubr.f32.gmra.mrb[0].mxu0 %v1589
    %v1699 = vpop.f32.mrb[0].mxu0
    %v1700 = vadd.f32 0.0, %v1699
    %v1701 = vpop.f32.mrb[0].mxu0
    %1702 = vmatprep.mubr.f32.mxu0 0.0
    %1703 = vmatmul.mubr.f32.gmra.mrb[0].mxu0 %v1590
    %v1704 = vpop.f32.mrb[0].mxu0
    %v1705 = vadd.f32 0.0, %v1704
    %v1706 = vpop.f32.mrb[0].mxu0
    %1707 = vmatprep.mubr.f32.mxu0 0.0
    %1708 = vmatmul.mubr.f32.gmra.mrb[0].mxu0 %v1591
    %v1709 = vpop.f32.mrb[0].mxu0
    %v1710 = vadd.f32 0.0, %v1709
    %v1711 = vpop.f32.mrb[0].mxu0
    %1712 = vmatprep.mubr.f32.mxu0 0.0
    %1713 = vmatmul.mubr.f32.gmra.mrb[0].mxu0 %v1592
    %v1714 = vpop.f32.mrb[0].mxu0
    %v1715 = vadd.f32 0.0, %v1714
    %v1716 = vpop.f32.mrb[0].mxu0
    %1717 = vmatprep.mubr.f32.mxu0 0.0
    %1718 = vmatmul.mubr.f32.gmra.mrb[0].mxu0 %v1593
    %v1719 = vpop.f32.mrb[0].mxu0
    %v1720 = vadd.f32 0.0, %v1719
    %v1721 = vpop.f32.mrb[0].mxu0
    %1722 = vmatprep.mubr.f32.mxu0 0.0
    %1723 = vmatmul.mubr.f32.gmra.mrb[0].mxu0 %v1594
    %v1724 = vpop.f32.mrb[0].mxu0
    %v1725 = vadd.f32 0.0, %v1724
    %v1726 = vpop.f32.mrb[0].mxu0
    %1727 = vmatprep.mubr.f32.mxu0 0.0
    %1728 = vmatmul.mubr.f32.gmra.mrb[0].mxu0 %v1595
    %v1729 = vpop.f32.mrb[0].mxu0
    %v1730 = vadd.f32 0.0, %v1729
    %v1731 = vpop.f32.mrb[0].mxu0
    %1732 = vmatprep.mubr.f32.mxu0 0.0
    %1733 = vmatmul.mubr.f32.gmra.mrb[0].mxu0 %v1596
    %v1734 = vpop.f32.mrb[0].mxu0
    %v1735 = vadd.f32 0.0, %v1734
    %v1736 = vpop.f32.mrb[0].mxu0
    %1737 = vmatprep.mubr.f32.mxu0 0.0
    %1738 = vmatmul.mubr.f32.gmra.mrb[0].mxu0 %v1597
    %v1739 = vpop.f32.mrb[0].mxu0
    %v1740 = vadd.f32 0.0, %v1739
    %v1741 = vpop.f32.mrb[0].mxu0
    %1742 = vdwg.mxu0
    %v1743 = vmul.f32 %v1665, 0.5
    %v1744 = vmul.f32 %v1670, 0.5
    %v1745 = vmul.f32 %v1675, 0.5
    %v1746 = vmul.f32 %v1680, 0.5
    %v1747 = vmul.f32 %v1705, 0.5
    %v1748 = vmul.f32 %v1710, 0.5
    %v1749 = vmul.f32 %v1715, 0.5
    %v1750 = vmul.f32 %v1720, 0.5
    %v1751 = vmul.f32 %v1685, 0.5
    %v1752 = vmul.f32 %v1690, 0.5
    %v1753 = vmul.f32 %v1695, 0.5
    %v1754 = vmul.f32 %v1700, 0.5
    %v1755 = vmul.f32 %v1725, 0.5
    %v1756 = vmul.f32 %v1730, 0.5
    %v1757 = vmul.f32 %v1735, 0.5
    %v1758 = vmul.f32 %v1740, 0.5
    %v1759 = vsub.f32 %v22, %v1743
    %v1760 = vsub.f32 %v23, %v1744
    %v1761 = vsub.f32 %v24, %v1745
    %v1762 = vsub.f32 %v25, %v1746
    %v1763 = vsub.f32 %v26, %v1747
    %v1764 = vsub.f32 %v27, %v1748
    %v1765 = vsub.f32 %v28, %v1749
    %v1766 = vsub.f32 %v29, %v1750
    %v1767 = vsub.f32 %v30, %v1751
    %v1768 = vsub.f32 %v31, %v1752
    %v1769 = vsub.f32 %v32, %v1753
    %v1770 = vsub.f32 %v33, %v1754
    %v1771 = vsub.f32 %v34, %v1755
    %v1772 = vsub.f32 %v35, %v1756
    %v1773 = vsub.f32 %v36, %v1757
    %v1774 = vsub.f32 %v37, %v1758
    %v1775 = vmul.f32 %v1759, %v1759
    %v1776 = vmul.f32 %v1760, %v1760
    %v1777 = vmul.f32 %v1761, %v1761
    %v1778 = vmul.f32 %v1762, %v1762
    %v1779 = vmul.f32 %v1763, %v1763
    %v1780 = vmul.f32 %v1764, %v1764
    %v1781 = vmul.f32 %v1765, %v1765
    %v1782 = vmul.f32 %v1766, %v1766
    %v1783 = vmul.f32 %v1767, %v1767
    %v1784 = vmul.f32 %v1768, %v1768
    %v1785 = vmul.f32 %v1769, %v1769
    %v1786 = vmul.f32 %v1770, %v1770
    %v1787 = vmul.f32 %v1771, %v1771
    %v1788 = vmul.f32 %v1772, %v1772
    %v1789 = vmul.f32 %v1773, %v1773
    %v1790 = vmul.f32 %v1774, %v1774
    %v1791 = vsel %vm63, %v1775, 0.0
    %1792 = vadd.xlane.f32.xlu0 %v1791
    %v1793 = vpop.xlane.xlu0 %1792
    %v1794 = vsel %vm63, %v1776, 0.0
    %1795 = vadd.xlane.f32.xlu0 %v1794
    %v1796 = vpop.xlane.xlu0 %1795
    %v1797 = vsel %vm63, %v1777, 0.0
    %1798 = vadd.xlane.f32.xlu0 %v1797
    %v1799 = vpop.xlane.xlu0 %1798
    %v1800 = vsel %vm63, %v1778, 0.0
    %1801 = vadd.xlane.f32.xlu0 %v1800
    %v1802 = vpop.xlane.xlu0 %1801
    %v1803 = vsel %vm63, %v1779, 0.0
    %1804 = vadd.xlane.f32.xlu0 %v1803
    %v1805 = vpop.xlane.xlu0 %1804
    %v1806 = vsel %vm63, %v1780, 0.0
    %1807 = vadd.xlane.f32.xlu0 %v1806
    %v1808 = vpop.xlane.xlu0 %1807
    %v1809 = vsel %vm63, %v1781, 0.0
    %1810 = vadd.xlane.f32.xlu0 %v1809
    %v1811 = vpop.xlane.xlu0 %1810
    %v1812 = vsel %vm63, %v1782, 0.0
    %1813 = vadd.xlane.f32.xlu0 %v1812
    %v1814 = vpop.xlane.xlu0 %1813
    %v1815 = vsel %vm63, %v1783, 0.0
    %1816 = vadd.xlane.f32.xlu0 %v1815
    %v1817 = vpop.xlane.xlu0 %1816
    %v1818 = vsel %vm63, %v1784, 0.0
    %1819 = vadd.xlane.f32.xlu0 %v1818
    %v1820 = vpop.xlane.xlu0 %1819
    %v1821 = vsel %vm63, %v1785, 0.0
    %1822 = vadd.xlane.f32.xlu0 %v1821
    %v1823 = vpop.xlane.xlu0 %1822
    %v1824 = vsel %vm63, %v1786, 0.0
    %1825 = vadd.xlane.f32.xlu0 %v1824
    %v1826 = vpop.xlane.xlu0 %1825
    %v1827 = vsel %vm63, %v1787, 0.0
    %1828 = vadd.xlane.f32.xlu0 %v1827
    %v1829 = vpop.xlane.xlu0 %1828
    %v1830 = vsel %vm63, %v1788, 0.0
    %1831 = vadd.xlane.f32.xlu0 %v1830
    %v1832 = vpop.xlane.xlu0 %1831
    %v1833 = vsel %vm63, %v1789, 0.0
    %1834 = vadd.xlane.f32.xlu0 %v1833
    %v1835 = vpop.xlane.xlu0 %1834
    %v1836 = vsel %vm63, %v1790, 0.0
    %1837 = vadd.xlane.f32.xlu0 %v1836
    %v1838 = vpop.xlane.xlu0 %1837
    %v1839 = vmax.f32 %v1793, 1e-12
    %v1840 = vmax.f32 %v1796, 1e-12
    %v1841 = vmax.f32 %v1799, 1e-12
    %v1842 = vmax.f32 %v1802, 1e-12
    %v1843 = vmax.f32 %v1805, 1e-12
    %v1844 = vmax.f32 %v1808, 1e-12
    %v1845 = vmax.f32 %v1811, 1e-12
    %v1846 = vmax.f32 %v1814, 1e-12
    %v1847 = vmax.f32 %v1817, 1e-12
    %v1848 = vmax.f32 %v1820, 1e-12
    %v1849 = vmax.f32 %v1823, 1e-12
    %v1850 = vmax.f32 %v1826, 1e-12
    %v1851 = vmax.f32 %v1829, 1e-12
    %v1852 = vmax.f32 %v1832, 1e-12
    %v1853 = vmax.f32 %v1835, 1e-12
    %v1854 = vmax.f32 %v1838, 1e-12
    %v1855 = vrsqrt.pop %v1839
    %v1856 = vmul.f32 %v1839, %v1855
    %vm1857 = vcmp.eq.f32.partialorder %v1839, inf
    %v1858 = vsel %vm1857, %v1839, %v1856
    %vm1859 = vcmp.eq.f32.partialorder %v1839, 0.0
    %v1860 = vand.u32 %v1839, 2147483648
    %v1861 = vsel %vm1859, %v1860, %v1858
    %v1862 = vrsqrt.pop %v1840
    %v1863 = vmul.f32 %v1840, %v1862
    %vm1864 = vcmp.eq.f32.partialorder %v1840, inf
    %v1865 = vsel %vm1864, %v1840, %v1863
    %vm1866 = vcmp.eq.f32.partialorder %v1840, 0.0
    %v1867 = vand.u32 %v1840, 2147483648
    %v1868 = vsel %vm1866, %v1867, %v1865
    %v1869 = vrsqrt.pop %v1841
    %v1870 = vmul.f32 %v1841, %v1869
    %vm1871 = vcmp.eq.f32.partialorder %v1841, inf
    %v1872 = vsel %vm1871, %v1841, %v1870
    %vm1873 = vcmp.eq.f32.partialorder %v1841, 0.0
    %v1874 = vand.u32 %v1841, 2147483648
    %v1875 = vsel %vm1873, %v1874, %v1872
    %v1876 = vrsqrt.pop %v1842
    %v1877 = vmul.f32 %v1842, %v1876
    %vm1878 = vcmp.eq.f32.partialorder %v1842, inf
    %v1879 = vsel %vm1878, %v1842, %v1877
    %vm1880 = vcmp.eq.f32.partialorder %v1842, 0.0
    %v1881 = vand.u32 %v1842, 2147483648
    %v1882 = vsel %vm1880, %v1881, %v1879
    %v1883 = vrsqrt.pop %v1843
    %v1884 = vmul.f32 %v1843, %v1883
    %vm1885 = vcmp.eq.f32.partialorder %v1843, inf
    %v1886 = vsel %vm1885, %v1843, %v1884
    %vm1887 = vcmp.eq.f32.partialorder %v1843, 0.0
    %v1888 = vand.u32 %v1843, 2147483648
    %v1889 = vsel %vm1887, %v1888, %v1886
    %v1890 = vrsqrt.pop %v1844
    %v1891 = vmul.f32 %v1844, %v1890
    %vm1892 = vcmp.eq.f32.partialorder %v1844, inf
    %v1893 = vsel %vm1892, %v1844, %v1891
    %vm1894 = vcmp.eq.f32.partialorder %v1844, 0.0
    %v1895 = vand.u32 %v1844, 2147483648
    %v1896 = vsel %vm1894, %v1895, %v1893
    %v1897 = vrsqrt.pop %v1845
    %v1898 = vmul.f32 %v1845, %v1897
    %vm1899 = vcmp.eq.f32.partialorder %v1845, inf
    %v1900 = vsel %vm1899, %v1845, %v1898
    %vm1901 = vcmp.eq.f32.partialorder %v1845, 0.0
    %v1902 = vand.u32 %v1845, 2147483648
    %v1903 = vsel %vm1901, %v1902, %v1900
    %v1904 = vrsqrt.pop %v1846
    %v1905 = vmul.f32 %v1846, %v1904
    %vm1906 = vcmp.eq.f32.partialorder %v1846, inf
    %v1907 = vsel %vm1906, %v1846, %v1905
    %vm1908 = vcmp.eq.f32.partialorder %v1846, 0.0
    %v1909 = vand.u32 %v1846, 2147483648
    %v1910 = vsel %vm1908, %v1909, %v1907
    %v1911 = vrsqrt.pop %v1847
    %v1912 = vmul.f32 %v1847, %v1911
    %vm1913 = vcmp.eq.f32.partialorder %v1847, inf
    %v1914 = vsel %vm1913, %v1847, %v1912
    %vm1915 = vcmp.eq.f32.partialorder %v1847, 0.0
    %v1916 = vand.u32 %v1847, 2147483648
    %v1917 = vsel %vm1915, %v1916, %v1914
    %v1918 = vrsqrt.pop %v1848
    %v1919 = vmul.f32 %v1848, %v1918
    %vm1920 = vcmp.eq.f32.partialorder %v1848, inf
    %v1921 = vsel %vm1920, %v1848, %v1919
    %vm1922 = vcmp.eq.f32.partialorder %v1848, 0.0
    %v1923 = vand.u32 %v1848, 2147483648
    %v1924 = vsel %vm1922, %v1923, %v1921
    %v1925 = vrsqrt.pop %v1849
    %v1926 = vmul.f32 %v1849, %v1925
    %vm1927 = vcmp.eq.f32.partialorder %v1849, inf
    %v1928 = vsel %vm1927, %v1849, %v1926
    %vm1929 = vcmp.eq.f32.partialorder %v1849, 0.0
    %v1930 = vand.u32 %v1849, 2147483648
    %v1931 = vsel %vm1929, %v1930, %v1928
    %v1932 = vrsqrt.pop %v1850
    %v1933 = vmul.f32 %v1850, %v1932
    %vm1934 = vcmp.eq.f32.partialorder %v1850, inf
    %v1935 = vsel %vm1934, %v1850, %v1933
    %vm1936 = vcmp.eq.f32.partialorder %v1850, 0.0
    %v1937 = vand.u32 %v1850, 2147483648
    %v1938 = vsel %vm1936, %v1937, %v1935
    %v1939 = vrsqrt.pop %v1851
    %v1940 = vmul.f32 %v1851, %v1939
    %vm1941 = vcmp.eq.f32.partialorder %v1851, inf
    %v1942 = vsel %vm1941, %v1851, %v1940
    %vm1943 = vcmp.eq.f32.partialorder %v1851, 0.0
    %v1944 = vand.u32 %v1851, 2147483648
    %v1945 = vsel %vm1943, %v1944, %v1942
    %v1946 = vrsqrt.pop %v1852
    %v1947 = vmul.f32 %v1852, %v1946
    %vm1948 = vcmp.eq.f32.partialorder %v1852, inf
    %v1949 = vsel %vm1948, %v1852, %v1947
    %vm1950 = vcmp.eq.f32.partialorder %v1852, 0.0
    %v1951 = vand.u32 %v1852, 2147483648
    %v1952 = vsel %vm1950, %v1951, %v1949
    %v1953 = vrsqrt.pop %v1853
    %v1954 = vmul.f32 %v1853, %v1953
    %vm1955 = vcmp.eq.f32.partialorder %v1853, inf
    %v1956 = vsel %vm1955, %v1853, %v1954
    %vm1957 = vcmp.eq.f32.partialorder %v1853, 0.0
    %v1958 = vand.u32 %v1853, 2147483648
    %v1959 = vsel %vm1957, %v1958, %v1956
    %v1960 = vrsqrt.pop %v1854
    %v1961 = vmul.f32 %v1854, %v1960
    %vm1962 = vcmp.eq.f32.partialorder %v1854, inf
    %v1963 = vsel %vm1962, %v1854, %v1961
    %vm1964 = vcmp.eq.f32.partialorder %v1854, 0.0
    %v1965 = vand.u32 %v1854, 2147483648
    %v1966 = vsel %vm1964, %v1965, %v1963
    %v1967 = vsub.f32 %v544, %v1861
    %v1968 = vsub.f32 %v551, %v1868
    %v1969 = vsub.f32 %v558, %v1875
    %v1970 = vsub.f32 %v565, %v1882
    %v1971 = vsub.f32 %v572, %v1889
    %v1972 = vsub.f32 %v579, %v1896
    %v1973 = vsub.f32 %v586, %v1903
    %v1974 = vsub.f32 %v593, %v1910
    %v1975 = vsub.f32 %v600, %v1917
    %v1976 = vsub.f32 %v607, %v1924
    %v1977 = vsub.f32 %v614, %v1931
    %v1978 = vsub.f32 %v621, %v1938
    %v1979 = vsub.f32 %v628, %v1945
    %v1980 = vsub.f32 %v635, %v1952
    %v1981 = vsub.f32 %v642, %v1959
    %v1982 = vsub.f32 %v649, %v1966
    %v1983 = vadd.f32 %v1967, 0.3
    %v1984 = vadd.f32 %v1968, 0.3
    %v1985 = vadd.f32 %v1969, 0.3
    %v1986 = vadd.f32 %v1970, 0.3
    %v1987 = vadd.f32 %v1971, 0.3
    %v1988 = vadd.f32 %v1972, 0.3
    %v1989 = vadd.f32 %v1973, 0.3
    %v1990 = vadd.f32 %v1974, 0.3
    %v1991 = vadd.f32 %v1975, 0.3
    %v1992 = vadd.f32 %v1976, 0.3
    %v1993 = vadd.f32 %v1977, 0.3
    %v1994 = vadd.f32 %v1978, 0.3
    %v1995 = vadd.f32 %v1979, 0.3
    %v1996 = vadd.f32 %v1980, 0.3
    %v1997 = vadd.f32 %v1981, 0.3
    %v1998 = vadd.f32 %v1982, 0.3
    %vm1999 = vcmp.gt.f32.partialorder %v1983, 0.0
    %vm2000 = vcmp.gt.f32.partialorder %v1984, 0.0
    %vm2001 = vcmp.gt.f32.partialorder %v1985, 0.0
    %vm2002 = vcmp.gt.f32.partialorder %v1986, 0.0
    %vm2003 = vcmp.gt.f32.partialorder %v1987, 0.0
    %vm2004 = vcmp.gt.f32.partialorder %v1988, 0.0
    %vm2005 = vcmp.gt.f32.partialorder %v1989, 0.0
    %vm2006 = vcmp.gt.f32.partialorder %v1990, 0.0
    %vm2007 = vcmp.gt.f32.partialorder %v1991, 0.0
    %vm2008 = vcmp.gt.f32.partialorder %v1992, 0.0
    %vm2009 = vcmp.gt.f32.partialorder %v1993, 0.0
    %vm2010 = vcmp.gt.f32.partialorder %v1994, 0.0
    %vm2011 = vcmp.gt.f32.partialorder %v1995, 0.0
    %vm2012 = vcmp.gt.f32.partialorder %v1996, 0.0
    %vm2013 = vcmp.gt.f32.partialorder %v1997, 0.0
    %vm2014 = vcmp.gt.f32.partialorder %v1998, 0.0
    %v2015 = vsel %vm1999, %v1983, 0.0
    %v2016 = vsel %vm2000, %v1984, 0.0
    %v2017 = vsel %vm2001, %v1985, 0.0
    %v2018 = vsel %vm2002, %v1986, 0.0
    %v2019 = vsel %vm2003, %v1987, 0.0
    %v2020 = vsel %vm2004, %v1988, 0.0
    %v2021 = vsel %vm2005, %v1989, 0.0
    %v2022 = vsel %vm2006, %v1990, 0.0
    %v2023 = vsel %vm2007, %v1991, 0.0
    %v2024 = vsel %vm2008, %v1992, 0.0
    %v2025 = vsel %vm2009, %v1993, 0.0
    %v2026 = vsel %vm2010, %v1994, 0.0
    %v2027 = vsel %vm2011, %v1995, 0.0
    %v2028 = vsel %vm2012, %v1996, 0.0
    %v2029 = vsel %vm2013, %v1997, 0.0
    %v2030 = vsel %vm2014, %v1998, 0.0
    %vm2031 = vcmask 7168
    %v2032 = vsel %vm2031, %v2015, 0.0
    %v2033 = vsel %vm2031, %v2016, 0.0
    %v2034 = vadd.f32 %v2032, %v2033
    %v2035 = vsel %vm2031, %v2017, 0.0
    %v2036 = vadd.f32 %v2034, %v2035
    %v2037 = vsel %vm2031, %v2018, 0.0
    %v2038 = vadd.f32 %v2036, %v2037
    %v2039 = vsel %vm2031, %v2019, 0.0
    %v2040 = vadd.f32 %v2038, %v2039
    %v2041 = vsel %vm2031, %v2020, 0.0
    %v2042 = vadd.f32 %v2040, %v2041
    %v2043 = vsel %vm2031, %v2021, 0.0
    %v2044 = vadd.f32 %v2042, %v2043
    %v2045 = vsel %vm2031, %v2022, 0.0
    %v2046 = vadd.f32 %v2044, %v2045
    %v2047 = vsel %vm2031, %v2023, 0.0
    %v2048 = vadd.f32 %v2046, %v2047
    %v2049 = vsel %vm2031, %v2024, 0.0
    %v2050 = vadd.f32 %v2048, %v2049
    %v2051 = vsel %vm2031, %v2025, 0.0
    %v2052 = vadd.f32 %v2050, %v2051
    %v2053 = vsel %vm2031, %v2026, 0.0
    %v2054 = vadd.f32 %v2052, %v2053
    %v2055 = vsel %vm2031, %v2027, 0.0
    %v2056 = vadd.f32 %v2054, %v2055
    %v2057 = vsel %vm2031, %v2028, 0.0
    %v2058 = vadd.f32 %v2056, %v2057
    %v2059 = vsel %vm2031, %v2029, 0.0
    %v2060 = vadd.f32 %v2058, %v2059
    %v2061 = vsel %vm2031, %v2030, 0.0
    %v2062 = vadd.f32 %v2060, %v2061
    %2063 = vadd.xlane.f32.xlu0 %v2062
    %v2064 = vpop.xlane.xlu0 %2063
    %v2065 = vrot.slane %v2064, 4
    %v2066 = vadd.f32 %v2064, %v2065
    %v2067 = vrot.slane %v2066, 2
    %v2068 = vadd.f32 %v2066, %v2067
    %v2069 = vrot.slane %v2068, 1
    %v2070 = vadd.f32 %v2068, %v2069
    %s2071 = vtos %v2070
    %v2072 = vrcp.pop 128.0
    %s2073 = vtos %v2072
    %s2074 = smul.f32 %s2071, %s2073
    %v2075 = vsel %vm1999, 1, 0
    %v2076 = vsel %vm2000, 1, 0
    %v2077 = vsel %vm2001, 1, 0
    %v2078 = vsel %vm2002, 1, 0
    %v2079 = vsel %vm2003, 1, 0
    %v2080 = vsel %vm2004, 1, 0
    %v2081 = vsel %vm2005, 1, 0
    %v2082 = vsel %vm2006, 1, 0
    %v2083 = vsel %vm2007, 1, 0
    %v2084 = vsel %vm2008, 1, 0
    %v2085 = vsel %vm2009, 1, 0
    %v2086 = vsel %vm2010, 1, 0
    %v2087 = vsel %vm2011, 1, 0
    %v2088 = vsel %vm2012, 1, 0
    %v2089 = vsel %vm2013, 1, 0
    %v2090 = vsel %vm2014, 1, 0
    %v2091 = vcvt.s32.f32 %v2075
    %v2092 = vcvt.s32.f32 %v2076
    %v2093 = vcvt.s32.f32 %v2077
    %v2094 = vcvt.s32.f32 %v2078
    %v2095 = vcvt.s32.f32 %v2079
    %v2096 = vcvt.s32.f32 %v2080
    %v2097 = vcvt.s32.f32 %v2081
    %v2098 = vcvt.s32.f32 %v2082
    %v2099 = vcvt.s32.f32 %v2083
    %v2100 = vcvt.s32.f32 %v2084
    %v2101 = vcvt.s32.f32 %v2085
    %v2102 = vcvt.s32.f32 %v2086
    %v2103 = vcvt.s32.f32 %v2087
    %v2104 = vcvt.s32.f32 %v2088
    %v2105 = vcvt.s32.f32 %v2089
    %v2106 = vcvt.s32.f32 %v2090
    %v2107 = vsel %vm2031, %v2091, 0.0
    %v2108 = vsel %vm2031, %v2092, 0.0
    %v2109 = vadd.f32 %v2107, %v2108
    %v2110 = vsel %vm2031, %v2093, 0.0
    %v2111 = vadd.f32 %v2109, %v2110
    %v2112 = vsel %vm2031, %v2094, 0.0
    %v2113 = vadd.f32 %v2111, %v2112
    %v2114 = vsel %vm2031, %v2095, 0.0
    %v2115 = vadd.f32 %v2113, %v2114
    %v2116 = vsel %vm2031, %v2096, 0.0
    %v2117 = vadd.f32 %v2115, %v2116
    %v2118 = vsel %vm2031, %v2097, 0.0
    %v2119 = vadd.f32 %v2117, %v2118
    %v2120 = vsel %vm2031, %v2098, 0.0
    %v2121 = vadd.f32 %v2119, %v2120
    %v2122 = vsel %vm2031, %v2099, 0.0
    %v2123 = vadd.f32 %v2121, %v2122
    %v2124 = vsel %vm2031, %v2100, 0.0
    %v2125 = vadd.f32 %v2123, %v2124
    %v2126 = vsel %vm2031, %v2101, 0.0
    %v2127 = vadd.f32 %v2125, %v2126
    %v2128 = vsel %vm2031, %v2102, 0.0
    %v2129 = vadd.f32 %v2127, %v2128
    %v2130 = vsel %vm2031, %v2103, 0.0
    %v2131 = vadd.f32 %v2129, %v2130
    %v2132 = vsel %vm2031, %v2104, 0.0
    %v2133 = vadd.f32 %v2131, %v2132
    %v2134 = vsel %vm2031, %v2105, 0.0
    %v2135 = vadd.f32 %v2133, %v2134
    %v2136 = vsel %vm2031, %v2106, 0.0
    %v2137 = vadd.f32 %v2135, %v2136
    %2138 = vadd.xlane.f32.xlu0 %v2137
    %v2139 = vpop.xlane.xlu0 %2138
    %v2140 = vrot.slane %v2139, 4
    %v2141 = vadd.f32 %v2139, %v2140
    %v2142 = vrot.slane %v2141, 2
    %v2143 = vadd.f32 %v2141, %v2142
    %v2144 = vrot.slane %v2143, 1
    %v2145 = vadd.f32 %v2143, %v2144
    %s2146 = vtos %v2145
    %s2147 = scalar_lea.smem [#allocation2], 0
    %2148 = sst [smem:[%s2147]] %s2074
    %s2149 = scvt.f32.s32.to.zero.pseudo %s2146
    %s2150 = scalar_lea.smem [#allocation4], 0
    %2151 = sst [smem:[%s2150]] %s2149
    // Predicated region
    $region18: #{tpu_custom_call.1} parent=1 // pred_check
      _
    $region19: #{tpu_custom_call.1} parent=1 // pred_check_branch
      %2153 = sbr.rel (0) target = $region21
    $region20: #{tpu_custom_call.1} parent=1 // pred_region
      %s2155 = ssub.s32 16, 16
      %2156 = vsyncadd [#allocation3], %s2155
      %2159 = dma.smem_to_hbm [#allocation2], 16, %s4, [#allocation3]
    $region21: #{tpu_custom_call.1} parent=1 // pred_fallthru
      _
    // Predicated region
    $region22: #{tpu_custom_call.1} parent=1 // pred_check
      _
    $region23: #{tpu_custom_call.1} parent=1 // pred_check_branch
      %2161 = sbr.rel (0) target = $region25
    $region24: #{tpu_custom_call.1} parent=1 // pred_region
      %s2163 = ssub.s32 16, 16
      %2164 = vsyncadd [#allocation5], %s2163
      %2167 = dma.smem_to_hbm [#allocation4], 16, %s5, [#allocation5]
    $region25: #{tpu_custom_call.1} parent=1 // pred_fallthru
      _
    // Predicated region
    $region26: #{tpu_custom_call.1} parent=1 // pred_check
      _
    $region27: #{tpu_custom_call.1} parent=1 // pred_check_branch
      %2169 = sbr.rel (0) target = $region29
    $region28: #{tpu_custom_call.1} parent=1 // pred_region
      %2170 = dma.done [#allocation3], 16
    $region29: #{tpu_custom_call.1} parent=1 // pred_fallthru
      _
    // Predicated region
    $region30: #{tpu_custom_call.1} parent=1 // pred_check
      _
    $region31: #{tpu_custom_call.1} parent=1 // pred_check_branch
      %2172 = sbr.rel (0) target = $region33
    $region32: #{tpu_custom_call.1} parent=1 // pred_region
      %2173 = dma.done [#allocation5], 16
    $region33: #{tpu_custom_call.1} parent=1 // pred_fallthru
      _
    %2174 = sfence
    %2175 = vsyncpa [#allocation3], 1
    %2176 = vsyncpa [#allocation5], 1

</llo_original>
